<compile_context>
chip_gen: v6e
topology: v6e:2x2x1
jax: 0.10.0
libtpu: 0.0.40
codegen_flags: <defaults>
</compile_context>

<pallas_src>
import functools

import jax
import jax.numpy as jnp
import numpy as np
from jax.experimental import pallas as pl
from jax.experimental.pallas import tpu as pltpu


# ----------------------------------------------------------------------------
# one-time host-side weight packing (run once at module init; review #1)
# ----------------------------------------------------------------------------
def _row_toeplitz_stacked(w_hwio, W, dtype):
    """(kH,kW,Ci,Co) HWIO conv weights -> (kH*W*Ci, W*Co) stacked block-Toeplitz.

    Block ky satisfies T_ky[wi*Ci+ci, wo*Co+co] = w[ky, wi-wo+1, ci, co] (zero
    outside the band), so [row(h-1)|row(h)|row(h+1)] @ T performs the full 3x3
    SAME conv (kx sweep + W-edge zero padding) as a single matmul.  Blocks are
    stacked ky=0,1,2 to match the lane order [a_dn | a | a_up] in the kernel.
    """
    kH, kW, Ci, Co = w_hwio.shape
    blocks = []
    for ky in range(kH):
        t = jnp.zeros((W * Ci, W * Co), jnp.float32)
        for kx in range(kW):
            e = jnp.eye(W, k=1 - kx, dtype=jnp.float32)          # wi = wo + kx - 1
            t = t + jnp.einsum('ab,ij->aibj', e,
                               w_hwio[ky, kx].astype(jnp.float32)
                               ).reshape(W * Ci, W * Co)
        blocks.append(t)
    return jnp.concatenate(blocks, axis=0).astype(dtype)          # (3*W*Ci, W*Co)


def pack_rcab_params(params, H, W, weight_dtype=jnp.float32):
    """Pack RCAB params into kernel constants. Call once, reuse across calls."""
    w1, b1, w2, b2, wd, bd, wu, bu = params
    C = w1.shape[2]
    t1 = _row_toeplitz_stacked(w1, W, weight_dtype)               # (3*W*C, W*C)
    t2 = _row_toeplitz_stacked(w2, W, weight_dtype)
    b1r = jnp.tile(b1.reshape(1, C), (1, W)).astype(jnp.float32)  # (1, W*C)
    b2r = jnp.tile(b2.reshape(1, C), (1, W)).astype(jnp.float32)
    eye_c = jnp.eye(C, dtype=jnp.float32)
    pool = jnp.tile(eye_c, (W, 1))                                # (W*C, C): sum over W
    adown = ((pool @ wd) / float(H * W)).astype(jnp.float32)      # mean-pool folded into 1x1
    aup = (wu @ jnp.tile(eye_c, (1, W))).astype(jnp.float32)      # 1x1 up-proj with W-tiling folded
    bdr = bd.reshape(1, -1).astype(jnp.float32)                   # (1, C/r)
    bur = jnp.tile(bu.reshape(1, C), (1, W)).astype(jnp.float32)  # (1, W*C)
    return (t1, b1r, t2, b2r, adown, bdr, aup, bur)


# ----------------------------------------------------------------------------
# kernel: TB batch images per grid step, everything in (TB*H, W*C) lane-dense rows
# ----------------------------------------------------------------------------
def _rcab_kernel(x_ref, t1_ref, b1_ref, t2_ref, b2_ref,
                 adown_ref, bd_ref, aup_ref, bu_ref,
                 ssum_ref, sbcast_ref, o_ref, *, H):
    x = x_ref[...]                                       # (R, M) = (TB*H, W*C)
    R = x.shape[0]

    # Per-image boundary masks for the row shifts (R and the grid offset are
    # multiples of H, so the local row index mod H is exact).
    row = jax.lax.broadcasted_iota(jnp.int32, (R, 1), 0) % H
    top_mask = (row != 0).astype(jnp.float32)            # zero rows wrapped from the image above
    bot_mask = (row != H - 1).astype(jnp.float32)        # zero rows wrapped from the image below

    def conv3x3(a, t_ref, b_ref):
        # XLU roll + VPU mask instead of shift matmuls (review #3).
        a_dn = pltpu.roll(a, shift=1, axis=0) * top_mask       # row h <- row h-1
        a_up = pltpu.roll(a, shift=R - 1, axis=0) * bot_mask   # row h <- row h+1
        # One K=3*M MXU dot against the pre-stacked Toeplitz (review #2);
        # concat is along 128-aligned lane chunks -> layout-only.
        stacked = jnp.concatenate([a_dn, a, a_up], axis=1)     # (R, 3*M)
        acc = jnp.dot(stacked.astype(t_ref.dtype), t_ref[...],
                      preferred_element_type=jnp.float32)
        return acc + b_ref[...]                                # (R, M) + (1, M)

    h1 = jnp.maximum(conv3x3(x, t1_ref, b1_ref), 0.0)          # (R, M)
    res = conv3x3(h1, t2_ref, b2_ref)                          # (R, M)

    # ---- channel attention (CALayer), folded to 2 dependent dots (review #4) --
    s = jnp.dot(ssum_ref[...], res, preferred_element_type=jnp.float32)       # (TB, M) per-image row sums
    y = jnp.maximum(
        jnp.dot(s, adown_ref[...], preferred_element_type=jnp.float32)
        + bd_ref[...], 0.0)                                                   # (TB, C/r)
    scale = jax.nn.sigmoid(
        jnp.dot(y, aup_ref[...], preferred_element_type=jnp.float32)
        + bu_ref[...])                                                        # (TB, M)
    scale_rows = jnp.dot(sbcast_ref[...], scale,
                         preferred_element_type=jnp.float32)                  # (R, M)

    # ---- scale + residual add -------------------------------------------------
    o_ref[...] = (res * scale_rows + x).astype(o_ref.dtype)


# ----------------------------------------------------------------------------
# wrapper
# ----------------------------------------------------------------------------
def rcab_pallas(x_nchw, packed, *, tb=None):
    """RCAB forward. x_nchw: (B, C, H, W) float32; `packed` from pack_rcab_params."""
    t1, b1r, t2, b2r, adown, bdr, aup, bur = packed
    B, C, H, W = x_nchw.shape
    M = W * C

    if tb is None:
        # Fold the whole batch into the matmul rows when small (review #5);
        # otherwise the largest divisor of B with tb*H <= 256 (MXU height).
        tb = B if B * H <= 256 else max(
            d for d in range(1, B + 1) if B % d == 0 and d * H <= 256)
    assert B % tb == 0
    R = tb * H

    # NCHW -> lane-dense row slabs (B*H, W*C)
    x_rows = jnp.transpose(x_nchw, (0, 2, 3, 1)).reshape(B * H, M)

    # tiny per-tile image-membership matrices for the CA pool / broadcast
    seg = jnp.arange(R) // H
    ssum = (jnp.arange(tb)[:, None] == seg[None, :]).astype(jnp.float32)   # (tb, R)
    sbcast = ssum.T                                                        # (R, tb)

    def rep(arr):
        # grid-invariant constant: same block every step (staged in VMEM once).
        # NOTE(review #8): for large W*C add pipeline_mode=pl.Buffered(1) here.
        n = arr.ndim
        return pl.BlockSpec(arr.shape, lambda i, _n=n: (0,) * _n)

    out = pl.pallas_call(
        functools.partial(_rcab_kernel, H=H),
        out_shape=jax.ShapeDtypeStruct((B * H, M), x_nchw.dtype),
        grid=(B // tb,),
        in_specs=[
            pl.BlockSpec((R, M), lambda i: (i, 0)),   # x row slab
            rep(t1), rep(b1r), rep(t2), rep(b2r),     # conv Toeplitz stacks + biases
            rep(adown), rep(bdr), rep(aup), rep(bur), # folded CA projections + biases
            rep(ssum), rep(sbcast),                   # per-image sum / broadcast selectors
        ],
        out_specs=pl.BlockSpec((R, M), lambda i: (i, 0)),
        compiler_params=pltpu.CompilerParams(
            # Weights dominate HBM bytes at tiny B: keep single-core (review #6).
            # Flip to ("parallel",) once per-step compute clearly exceeds the
            # per-core weight fetch (large B and >1 grid step).
            dimension_semantics=("arbitrary",)),
    )(x_rows, t1, b1r, t2, b2r, adown, bdr, aup, bur, ssum, sbcast)

    return jnp.transpose(out.reshape(B, H, W, C), (0, 3, 1, 2))   # -> NCHW


# ----------------------------------------------------------------------------
# pure-JAX reference mirroring the PyTorch module semantics
# ----------------------------------------------------------------------------
def rcab_reference(x_nchw, params):
    w1, b1, w2, b2, wd, bd, wu, bu = params
    dn = ('NCHW', 'HWIO', 'NCHW')
    h = jax.lax.conv_general_dilated(x_nchw, w1, (1, 1), 'SAME',
                                     dimension_numbers=dn) + b1.reshape(1, -1, 1, 1)
    h = jnp.maximum(h, 0.0)
    r = jax.lax.conv_general_dilated(h, w2, (1, 1), 'SAME',
                                     dimension_numbers=dn) + b2.reshape(1, -1, 1, 1)
    y = jnp.mean(r, axis=(2, 3), keepdims=True)
    y = jnp.maximum(jnp.einsum('bcij,cd->bdij', y, wd)
                    + bd.reshape(1, -1, 1, 1), 0.0)
    y = jax.nn.sigmoid(jnp.einsum('bcij,cd->bdij', y, wu)
                       + bu.reshape(1, -1, 1, 1))
    return r * y + x_nchw


if __name__ == "__main__":
    # n_feat=16, reduction=4, 16x16 spatial, batch=2
    B, C, H, W = 2, 16, 16, 16
    reduction = 4
    Cr = C // reduction

    key = jax.random.PRNGKey(0)
    ks = jax.random.split(key, 9)
    params = (
        jax.random.normal(ks[0], (3, 3, C, C), jnp.float32) * 0.05,  # conv1 w (HWIO)
        jax.random.normal(ks[1], (1, C), jnp.float32) * 0.01,        # conv1 b
        jax.random.normal(ks[2], (3, 3, C, C), jnp.float32) * 0.05,  # conv2 w
        jax.random.normal(ks[3], (1, C), jnp.float32) * 0.01,        # conv2 b
        jax.random.normal(ks[4], (C, Cr), jnp.float32) * 0.1,        # CA down w
        jax.random.normal(ks[5], (1, Cr), jnp.float32) * 0.01,       # CA down b
        jax.random.normal(ks[6], (Cr, C), jnp.float32) * 0.1,        # CA up w
        jax.random.normal(ks[7], (1, C), jnp.float32) * 0.01,        # CA up b
    )
    x = jax.random.normal(ks[8], (B, C, H, W), jnp.float32)

    # one-time packing (module init); f32 keeps the 1e-4 parity check (review #7:
    # pass weight_dtype=jnp.bfloat16 to halve weight HBM bytes, tol then ~1e-2).
    packed = pack_rcab_params(params, H, W, weight_dtype=jnp.float32)

    fwd = jax.jit(rcab_pallas)
    out = jax.block_until_ready(fwd(x, packed))
    ref = jax.block_until_ready(rcab_reference(x, params))

    np.testing.assert_allclose(np.asarray(out), np.asarray(ref),
                               rtol=1e-4, atol=1e-4)
    print("KERNEL_OK")
</pallas_src>

<mosaic_0001>
module attributes {stable_mosaic.version = 11 : i64} {
  func.func @_rcab_kernel(%arg0: i32, %arg1: memref<32x256xf32, #tpu.memory_space<vmem>>, %arg2: memref<768x256xf32, #tpu.memory_space<vmem>>, %arg3: memref<1x256xf32, #tpu.memory_space<vmem>>, %arg4: memref<768x256xf32, #tpu.memory_space<vmem>>, %arg5: memref<1x256xf32, #tpu.memory_space<vmem>>, %arg6: memref<256x4xf32, #tpu.memory_space<vmem>>, %arg7: memref<1x4xf32, #tpu.memory_space<vmem>>, %arg8: memref<4x256xf32, #tpu.memory_space<vmem>>, %arg9: memref<1x256xf32, #tpu.memory_space<vmem>>, %arg10: memref<2x32xf32, #tpu.memory_space<vmem>>, %arg11: memref<32x2xf32, #tpu.memory_space<vmem>>, %arg12: memref<32x256xf32, #tpu.memory_space<vmem>>) attributes {dimension_semantics = [#tpu.dimension_semantics<arbitrary>], iteration_bounds = array<i64: 1>, scalar_prefetch = 0 : i64, scratch_operands = 0 : i64, tpu.core_type = #tpu.core_type<tc>, window_params = [{transform_indices = @transform_0, window_bounds = array<i64: 32, 256>}, {pipeline_mode = #tpu.pipeline_mode<synchronous>, transform_indices = @transform_1, window_bounds = array<i64: 768, 256>}, {pipeline_mode = #tpu.pipeline_mode<synchronous>, transform_indices = @transform_2, window_bounds = array<i64: 1, 256>}, {pipeline_mode = #tpu.pipeline_mode<synchronous>, transform_indices = @transform_3, window_bounds = array<i64: 768, 256>}, {pipeline_mode = #tpu.pipeline_mode<synchronous>, transform_indices = @transform_4, window_bounds = array<i64: 1, 256>}, {pipeline_mode = #tpu.pipeline_mode<synchronous>, transform_indices = @transform_5, window_bounds = array<i64: 256, 4>}, {pipeline_mode = #tpu.pipeline_mode<synchronous>, transform_indices = @transform_6, window_bounds = array<i64: 1, 4>}, {pipeline_mode = #tpu.pipeline_mode<synchronous>, transform_indices = @transform_7, window_bounds = array<i64: 4, 256>}, {pipeline_mode = #tpu.pipeline_mode<synchronous>, transform_indices = @transform_8, window_bounds = array<i64: 1, 256>}, {pipeline_mode = #tpu.pipeline_mode<synchronous>, transform_indices = @transform_9, window_bounds = array<i64: 2, 32>}, {pipeline_mode = #tpu.pipeline_mode<synchronous>, transform_indices = @transform_10, window_bounds = array<i64: 32, 2>}, {transform_indices = @transform_11, window_bounds = array<i64: 32, 256>}]} {
    %c0 = arith.constant 0 : index
    %c0_0 = arith.constant 0 : index
    %0 = vector.load %arg1[%c0, %c0_0] : memref<32x256xf32, #tpu.memory_space<vmem>>, vector<32x256xf32>
    %1 = tpu.iota {dimensions = array<i32: 0>} : vector<32x1xi32>
    %c16_i32 = arith.constant 16 : i32
    %c0_i32 = arith.constant 0 : i32
    %2 = arith.cmpi eq, %c16_i32, %c0_i32 : i32
    %c1_i32 = arith.constant 1 : i32
    %3 = arith.select %2, %c1_i32, %c16_i32 : i32
    %4 = vector.broadcast %3 : i32 to vector<32x1xi32>
    %5 = arith.remsi %1, %4 : vector<32x1xi32>
    %c0_i32_1 = arith.constant 0 : i32
    %6 = vector.broadcast %c0_i32_1 : i32 to vector<32x1xi32>
    %7 = arith.cmpi ne, %5, %6 : vector<32x1xi32>
    %c0_i32_2 = arith.constant 0 : i32
    %8 = vector.broadcast %c0_i32_2 : i32 to vector<32x1xi32>
    %9 = arith.cmpi slt, %5, %8 : vector<32x1xi32>
    %c0_i32_3 = arith.constant 0 : i32
    %10 = arith.cmpi slt, %3, %c0_i32_3 : i32
    %11 = vector.broadcast %10 : i1 to vector<32x1xi1>
    %12 = vector.broadcast %11 : vector<32x1xi1> to vector<32x1xi1>
    %13 = arith.xori %9, %12 : vector<32x1xi1>
    %14 = arith.andi %13, %7 : vector<32x1xi1>
    %15 = vector.broadcast %3 : i32 to vector<32x1xi32>
    %16 = arith.addi %5, %15 : vector<32x1xi32>
    %17 = arith.select %14, %16, %5 : vector<32x1xi1>, vector<32x1xi32>
    %c0_i32_4 = arith.constant 0 : i32
    %18 = vector.broadcast %c0_i32_4 : i32 to vector<32x1xi32>
    %19 = arith.cmpi ne, %17, %18 : vector<32x1xi32>
    %20 = arith.extui %19 : vector<32x1xi1> to vector<32x1xi32>
    %21 = arith.sitofp %20 : vector<32x1xi32> to vector<32x1xf32>
    %c15_i32 = arith.constant 15 : i32
    %22 = vector.broadcast %c15_i32 : i32 to vector<32x1xi32>
    %23 = arith.cmpi ne, %17, %22 : vector<32x1xi32>
    %24 = arith.extui %23 : vector<32x1xi1> to vector<32x1xi32>
    %25 = arith.sitofp %24 : vector<32x1xi32> to vector<32x1xf32>
    %c1_i32_5 = arith.constant 1 : i32
    %26 = tpu.dynamic_rotate %0 by %c1_i32_5 dim 0 : vector<32x256xf32>, i32 -> vector<32x256xf32>
    %27 = vector.broadcast %21 : vector<32x1xf32> to vector<32x256xf32>
    %28 = arith.mulf %26, %27 : vector<32x256xf32>
    %c31_i32 = arith.constant 31 : i32
    %29 = tpu.dynamic_rotate %0 by %c31_i32 dim 0 : vector<32x256xf32>, i32 -> vector<32x256xf32>
    %30 = vector.broadcast %25 : vector<32x1xf32> to vector<32x256xf32>
    %31 = arith.mulf %29, %30 : vector<32x256xf32>
    %32 = tpu.concatenate %28, %0, %31 in 1 : vector<32x256xf32>, vector<32x256xf32>, vector<32x256xf32> -> vector<32x768xf32>
    %c0_6 = arith.constant 0 : index
    %c0_7 = arith.constant 0 : index
    %33 = vector.load %arg2[%c0_6, %c0_7] : memref<768x256xf32, #tpu.memory_space<vmem>>, vector<768x256xf32>
    %cst = arith.constant dense<0.000000e+00> : vector<32x256xf32>
    %34 = tpu.matmul %32, %33, %cst {dimension_numbers = #tpu.dot_dimension_numbers<[1], [0], [0], [1], [0, 0, 1, 1], [], []>} : vector<32x768xf32>, vector<768x256xf32>, vector<32x256xf32> -> vector<32x256xf32>
    %c0_8 = arith.constant 0 : index
    %c0_9 = arith.constant 0 : index
    %35 = vector.load %arg3[%c0_8, %c0_9] : memref<1x256xf32, #tpu.memory_space<vmem>>, vector<1x256xf32>
    %36 = vector.broadcast %35 : vector<1x256xf32> to vector<32x256xf32>
    %37 = arith.addf %34, %36 : vector<32x256xf32>
    %cst_10 = arith.constant 0.000000e+00 : f32
    %38 = vector.broadcast %cst_10 : f32 to vector<32x256xf32>
    %39 = arith.maximumf %37, %38 : vector<32x256xf32>
    %c1_i32_11 = arith.constant 1 : i32
    %40 = tpu.dynamic_rotate %39 by %c1_i32_11 dim 0 : vector<32x256xf32>, i32 -> vector<32x256xf32>
    %41 = vector.broadcast %21 : vector<32x1xf32> to vector<32x256xf32>
    %42 = arith.mulf %40, %41 : vector<32x256xf32>
    %c31_i32_12 = arith.constant 31 : i32
    %43 = tpu.dynamic_rotate %39 by %c31_i32_12 dim 0 : vector<32x256xf32>, i32 -> vector<32x256xf32>
    %44 = vector.broadcast %25 : vector<32x1xf32> to vector<32x256xf32>
    %45 = arith.mulf %43, %44 : vector<32x256xf32>
    %46 = tpu.concatenate %42, %39, %45 in 1 : vector<32x256xf32>, vector<32x256xf32>, vector<32x256xf32> -> vector<32x768xf32>
    %c0_13 = arith.constant 0 : index
    %c0_14 = arith.constant 0 : index
    %47 = vector.load %arg4[%c0_13, %c0_14] : memref<768x256xf32, #tpu.memory_space<vmem>>, vector<768x256xf32>
    %cst_15 = arith.constant dense<0.000000e+00> : vector<32x256xf32>
    %48 = tpu.matmul %46, %47, %cst_15 {dimension_numbers = #tpu.dot_dimension_numbers<[1], [0], [0], [1], [0, 0, 1, 1], [], []>} : vector<32x768xf32>, vector<768x256xf32>, vector<32x256xf32> -> vector<32x256xf32>
    %c0_16 = arith.constant 0 : index
    %c0_17 = arith.constant 0 : index
    %49 = vector.load %arg5[%c0_16, %c0_17] : memref<1x256xf32, #tpu.memory_space<vmem>>, vector<1x256xf32>
    %50 = vector.broadcast %49 : vector<1x256xf32> to vector<32x256xf32>
    %51 = arith.addf %48, %50 : vector<32x256xf32>
    %c0_18 = arith.constant 0 : index
    %c0_19 = arith.constant 0 : index
    %52 = vector.load %arg10[%c0_18, %c0_19] : memref<2x32xf32, #tpu.memory_space<vmem>>, vector<2x32xf32>
    %cst_20 = arith.constant dense<0.000000e+00> : vector<2x256xf32>
    %53 = tpu.matmul %52, %51, %cst_20 {dimension_numbers = #tpu.dot_dimension_numbers<[1], [0], [0], [1], [0, 0, 1, 1], [], []>} : vector<2x32xf32>, vector<32x256xf32>, vector<2x256xf32> -> vector<2x256xf32>
    %c0_21 = arith.constant 0 : index
    %c0_22 = arith.constant 0 : index
    %54 = vector.load %arg6[%c0_21, %c0_22] : memref<256x4xf32, #tpu.memory_space<vmem>>, vector<256x4xf32>
    %cst_23 = arith.constant dense<0.000000e+00> : vector<2x4xf32>
    %55 = tpu.matmul %53, %54, %cst_23 {dimension_numbers = #tpu.dot_dimension_numbers<[1], [0], [0], [1], [0, 0, 1, 1], [], []>} : vector<2x256xf32>, vector<256x4xf32>, vector<2x4xf32> -> vector<2x4xf32>
    %c0_24 = arith.constant 0 : index
    %c0_25 = arith.constant 0 : index
    %56 = vector.load %arg7[%c0_24, %c0_25] : memref<1x4xf32, #tpu.memory_space<vmem>>, vector<1x4xf32>
    %57 = vector.broadcast %56 : vector<1x4xf32> to vector<2x4xf32>
    %58 = arith.addf %55, %57 : vector<2x4xf32>
    %cst_26 = arith.constant 0.000000e+00 : f32
    %59 = vector.broadcast %cst_26 : f32 to vector<2x4xf32>
    %60 = arith.maximumf %58, %59 : vector<2x4xf32>
    %c0_27 = arith.constant 0 : index
    %c0_28 = arith.constant 0 : index
    %61 = vector.load %arg8[%c0_27, %c0_28] : memref<4x256xf32, #tpu.memory_space<vmem>>, vector<4x256xf32>
    %cst_29 = arith.constant dense<0.000000e+00> : vector<2x256xf32>
    %62 = tpu.matmul %60, %61, %cst_29 {dimension_numbers = #tpu.dot_dimension_numbers<[1], [0], [0], [1], [0, 0, 1, 1], [], []>} : vector<2x4xf32>, vector<4x256xf32>, vector<2x256xf32> -> vector<2x256xf32>
    %c0_30 = arith.constant 0 : index
    %c0_31 = arith.constant 0 : index
    %63 = vector.load %arg9[%c0_30, %c0_31] : memref<1x256xf32, #tpu.memory_space<vmem>>, vector<1x256xf32>
    %64 = vector.broadcast %63 : vector<1x256xf32> to vector<2x256xf32>
    %65 = arith.addf %62, %64 : vector<2x256xf32>
    %66 = arith.negf %65 : vector<2x256xf32>
    %67 = math.exp %66 : vector<2x256xf32>
    %cst_32 = arith.constant 1.000000e+00 : f32
    %68 = vector.broadcast %cst_32 : f32 to vector<2x256xf32>
    %69 = arith.addf %68, %67 : vector<2x256xf32>
    %70 = arith.divf %68, %69 : vector<2x256xf32>
    %c0_33 = arith.constant 0 : index
    %c0_34 = arith.constant 0 : index
    %71 = vector.load %arg11[%c0_33, %c0_34] : memref<32x2xf32, #tpu.memory_space<vmem>>, vector<32x2xf32>
    %cst_35 = arith.constant dense<0.000000e+00> : vector<32x256xf32>
    %72 = tpu.matmul %71, %70, %cst_35 {dimension_numbers = #tpu.dot_dimension_numbers<[1], [0], [0], [1], [0, 0, 1, 1], [], []>} : vector<32x2xf32>, vector<2x256xf32>, vector<32x256xf32> -> vector<32x256xf32>
    %73 = arith.mulf %51, %72 : vector<32x256xf32>
    %74 = arith.addf %73, %0 : vector<32x256xf32>
    %c0_36 = arith.constant 0 : index
    %c0_37 = arith.constant 0 : index
    %75 = vector.load %arg12[%c0_36, %c0_37] : memref<32x256xf32, #tpu.memory_space<vmem>>, vector<32x256xf32>
    tpu.vector_store %arg12[%c0_36, %c0_37], %74 {strides = array<i32>} : memref<32x256xf32, #tpu.memory_space<vmem>>, vector<32x256xf32>,
    return
  }
  func.func @transform_0(%arg0: i32) -> (i32, i32) {
    %c0_i32 = arith.constant 0 : i32
    %c0_i32_0 = arith.constant 0 : i32
    return %arg0, %c0_i32 : i32, i32
  }
  func.func @transform_1(%arg0: i32) -> (i32, i32) {
    %c0_i32 = arith.constant 0 : i32
    %c0_i32_0 = arith.constant 0 : i32
    %c0_i32_1 = arith.constant 0 : i32
    return %c0_i32, %c0_i32_0 : i32, i32
  }
  func.func @transform_2(%arg0: i32) -> (i32, i32) {
    %c0_i32 = arith.constant 0 : i32
    %c0_i32_0 = arith.constant 0 : i32
    %c0_i32_1 = arith.constant 0 : i32
    return %c0_i32, %c0_i32_0 : i32, i32
  }
  func.func @transform_3(%arg0: i32) -> (i32, i32) {
    %c0_i32 = arith.constant 0 : i32
    %c0_i32_0 = arith.constant 0 : i32
    %c0_i32_1 = arith.constant 0 : i32
    return %c0_i32, %c0_i32_0 : i32, i32
  }
  func.func @transform_4(%arg0: i32) -> (i32, i32) {
    %c0_i32 = arith.constant 0 : i32
    %c0_i32_0 = arith.constant 0 : i32
    %c0_i32_1 = arith.constant 0 : i32
    return %c0_i32, %c0_i32_0 : i32, i32
  }
  func.func @transform_5(%arg0: i32) -> (i32, i32) {
    %c0_i32 = arith.constant 0 : i32
    %c0_i32_0 = arith.constant 0 : i32
    %c0_i32_1 = arith.constant 0 : i32
    return %c0_i32, %c0_i32_0 : i32, i32
  }
  func.func @transform_6(%arg0: i32) -> (i32, i32) {
    %c0_i32 = arith.constant 0 : i32
    %c0_i32_0 = arith.constant 0 : i32
    %c0_i32_1 = arith.constant 0 : i32
    return %c0_i32, %c0_i32_0 : i32, i32
  }
  func.func @transform_7(%arg0: i32) -> (i32, i32) {
    %c0_i32 = arith.constant 0 : i32
    %c0_i32_0 = arith.constant 0 : i32
    %c0_i32_1 = arith.constant 0 : i32
    return %c0_i32, %c0_i32_0 : i32, i32
  }
  func.func @transform_8(%arg0: i32) -> (i32, i32) {
    %c0_i32 = arith.constant 0 : i32
    %c0_i32_0 = arith.constant 0 : i32
    %c0_i32_1 = arith.constant 0 : i32
    return %c0_i32, %c0_i32_0 : i32, i32
  }
  func.func @transform_9(%arg0: i32) -> (i32, i32) {
    %c0_i32 = arith.constant 0 : i32
    %c0_i32_0 = arith.constant 0 : i32
    %c0_i32_1 = arith.constant 0 : i32
    return %c0_i32, %c0_i32_0 : i32, i32
  }
  func.func @transform_10(%arg0: i32) -> (i32, i32) {
    %c0_i32 = arith.constant 0 : i32
    %c0_i32_0 = arith.constant 0 : i32
    %c0_i32_1 = arith.constant 0 : i32
    return %c0_i32, %c0_i32_0 : i32, i32
  }
  func.func @transform_11(%arg0: i32) -> (i32, i32) {
    %c0_i32 = arith.constant 0 : i32
    %c0_i32_0 = arith.constant 0 : i32
    return %arg0, %c0_i32 : i32, i32
  }
}

</mosaic_0001>

<llo_original>
// kernel: rcab_pallas.1
$region0: #{rcab_pallas.1}
  #allocation0 [shape = 'u32[]', space=smem, size = 0x4, offset = 0x4, fixed_abs, tag = 'smem constant byte address 0x4 - core index']
  #allocation1 [shape = 'u32[144,128]{1,0:T(1,128)}', space=vmem, size = 0x12000, scoped, tag = 'internal scratch']
  %s0 = inlined_call_operand.vmem [shape: f32[32,256], index: 0, kind: input, shape index: {}]
  %s1 = inlined_call_operand.vmem [shape: f32[768,256], index: 1, kind: input, shape index: {}]
  %s2 = inlined_call_operand.vmem [shape: f32[1,256], index: 2, kind: input, shape index: {}]
  %s3 = inlined_call_operand.hbm [shape: f32[768,256], index: 3, kind: input, shape index: {}]
  %s4 = inlined_call_operand.vmem [shape: f32[1,256], index: 4, kind: input, shape index: {}]
  %s5 = inlined_call_operand.vmem [shape: f32[256,4], index: 5, kind: input, shape index: {}]
  %s6 = inlined_call_operand.vmem [shape: f32[1,4], index: 6, kind: input, shape index: {}]
  %s7 = inlined_call_operand.vmem [shape: f32[4,256], index: 7, kind: input, shape index: {}]
  %s8 = inlined_call_operand.vmem [shape: f32[1,256], index: 8, kind: input, shape index: {}]
  %s9 = inlined_call_operand.vmem [shape: f32[2,32], index: 9, kind: input, shape index: {}]
  %s10 = inlined_call_operand.vmem [shape: f32[32,2], index: 10, kind: input, shape index: {}]
  %s11 = inlined_call_operand.vmem [shape: f32[32,256], index: 11, kind: output, shape index: {}]
  %s12 = sld [smem:[#allocation0]]
  $region58: #{rcab_pallas.1} parent=0
    _
  %s14 = ssub.s32 1, %s12
  %s15 = scalar_select 0, %s14, %s12
  $region1: #{rcab_pallas.1} parent=0
    #allocation2 [shape = 'u8[786432]{0}', space=vmem, size = 0xc0000, scoped, tag = 'input window, operand 3, single buffered']
    #allocation3 [shape = 's32[1]{0}', space=sflag, size = 0x4, scoped, tag = 'scoped memory for rcab_pallas.1']
    %16 = vsyncpa [#allocation3], 0
    // Predicated region
    $region2: #{rcab_pallas.1} parent=1 // pred_check
      _
    $region3: #{rcab_pallas.1} parent=1 // pred_check_branch
      %18 = sbr.rel (0) target = $region5
    $region4: #{rcab_pallas.1} parent=1 // pred_region
      _
    $region5: #{rcab_pallas.1} parent=1 // pred_fallthru
      _
    // Predicated region
    $region6: #{rcab_pallas.1} parent=1 // pred_check
      _
    $region7: #{rcab_pallas.1} parent=1 // pred_check_branch
      %20 = sbr.rel (0) target = $region9
    $region8: #{rcab_pallas.1} parent=1 // pred_region
      _
    $region9: #{rcab_pallas.1} parent=1 // pred_fallthru
      _
    // Predicated region
    $region10: #{rcab_pallas.1} parent=1 // pred_check
      _
    $region11: #{rcab_pallas.1} parent=1 // pred_check_branch
      %22 = sbr.rel (0) target = $region13
    $region12: #{rcab_pallas.1} parent=1 // pred_region
      _
    $region13: #{rcab_pallas.1} parent=1 // pred_fallthru
      _
    // Predicated region
    $region14: #{rcab_pallas.1} parent=1 // pred_check
      _
    $region15: #{rcab_pallas.1} parent=1 // pred_check_branch
      %24 = sbr.rel (0) target = $region17
    $region16: #{rcab_pallas.1} parent=1 // pred_region
      %s26 = ssub.s32 24576, 24576
      %27 = vsyncadd [#allocation3], %s26
      %s28 = sshll.u32 [#allocation2], 4
      %s29 = int_to_ptr.vmem [resolvable:$true] %s28
      %34 = dma.hbm_to_vmem [thread:$0]  %s3, 24576, %s29, [#allocation3], 256, 256, 16
    $region17: #{rcab_pallas.1} parent=1 // pred_fallthru
      _
    // Predicated region
    $region18: #{rcab_pallas.1} parent=1 // pred_check
      _
    $region19: #{rcab_pallas.1} parent=1 // pred_check_branch
      %36 = sbr.rel (0) target = $region21
    $region20: #{rcab_pallas.1} parent=1 // pred_region
      _
    $region21: #{rcab_pallas.1} parent=1 // pred_fallthru
      _
    // Predicated region
    $region22: #{rcab_pallas.1} parent=1 // pred_check
      _
    $region23: #{rcab_pallas.1} parent=1 // pred_check_branch
      %38 = sbr.rel (0) target = $region25
    $region24: #{rcab_pallas.1} parent=1 // pred_region
      _
    $region25: #{rcab_pallas.1} parent=1 // pred_fallthru
      _
    // Predicated region
    $region26: #{rcab_pallas.1} parent=1 // pred_check
      _
    $region27: #{rcab_pallas.1} parent=1 // pred_check_branch
      %40 = sbr.rel (0) target = $region29
    $region28: #{rcab_pallas.1} parent=1 // pred_region
      _
    $region29: #{rcab_pallas.1} parent=1 // pred_fallthru
      _
    // Predicated region
    $region30: #{rcab_pallas.1} parent=1 // pred_check
      _
    $region31: #{rcab_pallas.1} parent=1 // pred_check_branch
      %42 = sbr.rel (0) target = $region33
    $region32: #{rcab_pallas.1} parent=1 // pred_region
      _
    $region33: #{rcab_pallas.1} parent=1 // pred_fallthru
      _
    // Predicated region
    $region34: #{rcab_pallas.1} parent=1 // pred_check
      _
    $region35: #{rcab_pallas.1} parent=1 // pred_check_branch
      %44 = sbr.rel (0) target = $region37
    $region36: #{rcab_pallas.1} parent=1 // pred_region
      _
    $region37: #{rcab_pallas.1} parent=1 // pred_fallthru
      _
    // Predicated region
    $region38: #{rcab_pallas.1} parent=1 // pred_check
      _
    $region39: #{rcab_pallas.1} parent=1 // pred_check_branch
      %46 = sbr.rel (0) target = $region41
    $region40: #{rcab_pallas.1} parent=1 // pred_region
      _
    $region41: #{rcab_pallas.1} parent=1 // pred_fallthru
      _
    // Predicated region
    $region42: #{rcab_pallas.1} parent=1 // pred_check
      _
    $region43: #{rcab_pallas.1} parent=1 // pred_check_branch
      %48 = sbr.rel (0) target = $region45
    $region44: #{rcab_pallas.1} parent=1 // pred_region
      _
    $region45: #{rcab_pallas.1} parent=1 // pred_fallthru
      _
    // Predicated region
    $region46: #{rcab_pallas.1} parent=1 // pred_check
      _
    $region47: #{rcab_pallas.1} parent=1 // pred_check_branch
      %50 = sbr.rel (0) target = $region49
    $region48: #{rcab_pallas.1} parent=1 // pred_region
      %51 = dma.done [#allocation3], 24576
    $region49: #{rcab_pallas.1} parent=1 // pred_fallthru
      _
    %v52 = vld [vmem:[%s0] sm:$0xff]
    %v53 = vld [vmem:[%s0 + $0x8] sm:$0xff]
    %v54 = vld [vmem:[%s0 + $0x10] sm:$0xff]
    %v55 = vld [vmem:[%s0 + $0x18] sm:$0xff]
    %v56 = vld [vmem:[%s0 + $0x20] sm:$0xff]
    %v57 = vld [vmem:[%s0 + $0x28] sm:$0xff]
    %v58 = vld [vmem:[%s0 + $0x30] sm:$0xff]
    %v59 = vld [vmem:[%s0 + $0x38] sm:$0xff]
    %v60 = vlaneseq
    %v61 = vshrl.u32 %v60, 7
    %v62 = vadd.s32 %v61, 8
    %v63 = vadd.s32 %v61, 16
    %v64 = vadd.s32 %v61, 24
    %vm65 = vcmp.lt.s32.totalorder %v61, 0
    %v66 = vsub.s32 0, %v61
    %v67 = vsel %vm65, %v66, %v61
    %v68 = vshrl.u32 %v67, 4
    %v69 = vand.u32 %v67, 15
    %v70 = vsub.s32 0, %v69
    %v71 = vsel %vm65, %v70, %v69
    %vm72 = vcmp.lt.s32.totalorder %v62, 0
    %v73 = vsub.s32 0, %v62
    %v74 = vsel %vm72, %v73, %v62
    %v75 = vshrl.u32 %v74, 4
    %v76 = vand.u32 %v74, 15
    %v77 = vsub.s32 0, %v76
    %v78 = vsel %vm72, %v77, %v76
    %vm79 = vcmp.lt.s32.totalorder %v63, 0
    %v80 = vsub.s32 0, %v63
    %v81 = vsel %vm79, %v80, %v63
    %v82 = vshrl.u32 %v81, 4
    %v83 = vand.u32 %v81, 15
    %v84 = vsub.s32 0, %v83
    %v85 = vsel %vm79, %v84, %v83
    %vm86 = vcmp.lt.s32.totalorder %v64, 0
    %v87 = vsub.s32 0, %v64
    %v88 = vsel %vm86, %v87, %v64
    %v89 = vshrl.u32 %v88, 4
    %v90 = vand.u32 %v88, 15
    %v91 = vsub.s32 0, %v90
    %v92 = vsel %vm86, %v91, %v90
    %vm93 = vcmp.ne.s32.totalorder %v71, 0
    %vm94 = vcmp.ne.s32.totalorder %v78, 0
    %vm95 = vcmp.ne.s32.totalorder %v85, 0
    %vm96 = vcmp.ne.s32.totalorder %v92, 0
    %vm97 = vcmp.lt.s32.totalorder %v71, 0
    %vm98 = vcmp.lt.s32.totalorder %v78, 0
    %vm99 = vcmp.lt.s32.totalorder %v85, 0
    %vm100 = vcmp.lt.s32.totalorder %v92, 0
    %vm101 = vmand %vm97, %vm93
    %vm102 = vmand %vm98, %vm94
    %vm103 = vmand %vm99, %vm95
    %vm104 = vmand %vm100, %vm96
    %v105 = vadd.s32 %v71, 16
    %v106 = vadd.s32 %v78, 16
    %v107 = vadd.s32 %v85, 16
    %v108 = vadd.s32 %v92, 16
    %v109 = vsel %vm101, %v105, %v71
    %v110 = vsel %vm102, %v106, %v78
    %v111 = vsel %vm103, %v107, %v85
    %v112 = vsel %vm104, %v108, %v92
    %vm113 = vcmp.ne.s32.totalorder %v109, 0
    %vm114 = vcmp.ne.s32.totalorder %v110, 0
    %vm115 = vcmp.ne.s32.totalorder %v111, 0
    %vm116 = vcmp.ne.s32.totalorder %v112, 0
    %v117 = vsel %vm113, 1, 0
    %v118 = vsel %vm114, 1, 0
    %v119 = vsel %vm115, 1, 0
    %v120 = vsel %vm116, 1, 0
    %v121 = vcvt.s32.f32 %v117
    %v122 = vcvt.s32.f32 %v118
    %v123 = vcvt.s32.f32 %v119
    %v124 = vcvt.s32.f32 %v120
    %vm125 = vcmp.ne.s32.totalorder %v109, 15
    %vm126 = vcmp.ne.s32.totalorder %v110, 15
    %vm127 = vcmp.ne.s32.totalorder %v111, 15
    %vm128 = vcmp.ne.s32.totalorder %v112, 15
    %v129 = vsel %vm125, 1, 0
    %v130 = vsel %vm126, 1, 0
    %v131 = vsel %vm127, 1, 0
    %v132 = vsel %vm128, 1, 0
    %v133 = vcvt.s32.f32 %v129
    %v134 = vcvt.s32.f32 %v130
    %v135 = vcvt.s32.f32 %v131
    %v136 = vcvt.s32.f32 %v132
    %v137 = vrot.slane %v52, 7
    %v138 = vrot.slane %v53, 7
    %v139 = vrot.slane %v54, 7
    %v140 = vrot.slane %v55, 7
    %v141 = vrot.slane %v56, 7
    %v142 = vrot.slane %v57, 7
    %v143 = vrot.slane %v58, 7
    %v144 = vrot.slane %v59, 7
    %vm145 = vcmp.lt.s32.totalorder %v61, 1
    %v146 = vsel %vm145, %v141, %v143
    %v147 = vsel %vm145, %v142, %v144
    %v148 = vsel %vm145, %v139, %v141
    %v149 = vsel %vm145, %v140, %v142
    %v150 = vsel %vm145, %v137, %v139
    %v151 = vsel %vm145, %v138, %v140
    %v152 = vsel %vm145, %v143, %v137
    %v153 = vsel %vm145, %v144, %v138
    %v154 = vmul.f32 %v152, %v121
    %v155 = vmul.f32 %v153, %v121
    %v156 = vmul.f32 %v150, %v122
    %v157 = vmul.f32 %v151, %v122
    %v158 = vmul.f32 %v148, %v123
    %v159 = vmul.f32 %v149, %v123
    %v160 = vmul.f32 %v146, %v124
    %v161 = vmul.f32 %v147, %v124
    %v162 = vrot.slane %v52, 1
    %v163 = vrot.slane %v53, 1
    %v164 = vrot.slane %v54, 1
    %v165 = vrot.slane %v55, 1
    %v166 = vrot.slane %v56, 1
    %v167 = vrot.slane %v57, 1
    %v168 = vrot.slane %v58, 1
    %v169 = vrot.slane %v59, 1
    %vm170 = vcmp.lt.s32.totalorder %v61, 7
    %v171 = vsel %vm170, %v166, %v168
    %v172 = vsel %vm170, %v167, %v169
    %v173 = vsel %vm170, %v164, %v166
    %v174 = vsel %vm170, %v165, %v167
    %v175 = vsel %vm170, %v162, %v164
    %v176 = vsel %vm170, %v163, %v165
    %v177 = vsel %vm170, %v168, %v162
    %v178 = vsel %vm170, %v169, %v163
    %v179 = vmul.f32 %v175, %v133
    %v180 = vmul.f32 %v176, %v133
    %v181 = vmul.f32 %v173, %v134
    %v182 = vmul.f32 %v174, %v134
    %v183 = vmul.f32 %v171, %v135
    %v184 = vmul.f32 %v172, %v135
    %v185 = vmul.f32 %v177, %v136
    %v186 = vmul.f32 %v178, %v136
    %v187 = vld [vmem:[%s1] sm:$0xff]
    %v188 = vld [vmem:[%s1 + $0x8] sm:$0xff]
    %v189 = vld [vmem:[%s1 + $0x10] sm:$0xff]
    %v190 = vld [vmem:[%s1 + $0x18] sm:$0xff]
    %v191 = vld [vmem:[%s1 + $0x20] sm:$0xff]
    %v192 = vld [vmem:[%s1 + $0x28] sm:$0xff]
    %v193 = vld [vmem:[%s1 + $0x30] sm:$0xff]
    %v194 = vld [vmem:[%s1 + $0x38] sm:$0xff]
    %v195 = vld [vmem:[%s1 + $0x40] sm:$0xff]
    %v196 = vld [vmem:[%s1 + $0x48] sm:$0xff]
    %v197 = vld [vmem:[%s1 + $0x50] sm:$0xff]
    %v198 = vld [vmem:[%s1 + $0x58] sm:$0xff]
    %v199 = vld [vmem:[%s1 + $0x60] sm:$0xff]
    %v200 = vld [vmem:[%s1 + $0x68] sm:$0xff]
    %v201 = vld [vmem:[%s1 + $0x70] sm:$0xff]
    %v202 = vld [vmem:[%s1 + $0x78] sm:$0xff]
    %v203 = vld [vmem:[%s1 + $0x80] sm:$0xff]
    %v204 = vld [vmem:[%s1 + $0x88] sm:$0xff]
    %v205 = vld [vmem:[%s1 + $0x90] sm:$0xff]
    %v206 = vld [vmem:[%s1 + $0x98] sm:$0xff]
    %v207 = vld [vmem:[%s1 + $0xa0] sm:$0xff]
    %v208 = vld [vmem:[%s1 + $0xa8] sm:$0xff]
    %v209 = vld [vmem:[%s1 + $0xb0] sm:$0xff]
    %v210 = vld [vmem:[%s1 + $0xb8] sm:$0xff]
    %v211 = vld [vmem:[%s1 + $0xc0] sm:$0xff]
    %v212 = vld [vmem:[%s1 + $0xc8] sm:$0xff]
    %v213 = vld [vmem:[%s1 + $0xd0] sm:$0xff]
    %v214 = vld [vmem:[%s1 + $0xd8] sm:$0xff]
    %v215 = vld [vmem:[%s1 + $0xe0] sm:$0xff]
    %v216 = vld [vmem:[%s1 + $0xe8] sm:$0xff]
    %v217 = vld [vmem:[%s1 + $0xf0] sm:$0xff]
    %v218 = vld [vmem:[%s1 + $0xf8] sm:$0xff]
    %v219 = vld [vmem:[%s1 + $0x100] sm:$0xff]
    %v220 = vld [vmem:[%s1 + $0x108] sm:$0xff]
    %v221 = vld [vmem:[%s1 + $0x110] sm:$0xff]
    %v222 = vld [vmem:[%s1 + $0x118] sm:$0xff]
    %v223 = vld [vmem:[%s1 + $0x120] sm:$0xff]
    %v224 = vld [vmem:[%s1 + $0x128] sm:$0xff]
    %v225 = vld [vmem:[%s1 + $0x130] sm:$0xff]
    %v226 = vld [vmem:[%s1 + $0x138] sm:$0xff]
    %v227 = vld [vmem:[%s1 + $0x140] sm:$0xff]
    %v228 = vld [vmem:[%s1 + $0x148] sm:$0xff]
    %v229 = vld [vmem:[%s1 + $0x150] sm:$0xff]
    %v230 = vld [vmem:[%s1 + $0x158] sm:$0xff]
    %v231 = vld [vmem:[%s1 + $0x160] sm:$0xff]
    %v232 = vld [vmem:[%s1 + $0x168] sm:$0xff]
    %v233 = vld [vmem:[%s1 + $0x170] sm:$0xff]
    %v234 = vld [vmem:[%s1 + $0x178] sm:$0xff]
    %v235 = vld [vmem:[%s1 + $0x180] sm:$0xff]
    %v236 = vld [vmem:[%s1 + $0x188] sm:$0xff]
    %v237 = vld [vmem:[%s1 + $0x190] sm:$0xff]
    %v238 = vld [vmem:[%s1 + $0x198] sm:$0xff]
    %v239 = vld [vmem:[%s1 + $0x1a0] sm:$0xff]
    %v240 = vld [vmem:[%s1 + $0x1a8] sm:$0xff]
    %v241 = vld [vmem:[%s1 + $0x1b0] sm:$0xff]
    %v242 = vld [vmem:[%s1 + $0x1b8] sm:$0xff]
    %v243 = vld [vmem:[%s1 + $0x1c0] sm:$0xff]
    %v244 = vld [vmem:[%s1 + $0x1c8] sm:$0xff]
    %v245 = vld [vmem:[%s1 + $0x1d0] sm:$0xff]
    %v246 = vld [vmem:[%s1 + $0x1d8] sm:$0xff]
    %v247 = vld [vmem:[%s1 + $0x1e0] sm:$0xff]
    %v248 = vld [vmem:[%s1 + $0x1e8] sm:$0xff]
    %v249 = vld [vmem:[%s1 + $0x1f0] sm:$0xff]
    %v250 = vld [vmem:[%s1 + $0x1f8] sm:$0xff]
    %v251 = vld [vmem:[%s1 + $0x200] sm:$0xff]
    %v252 = vld [vmem:[%s1 + $0x208] sm:$0xff]
    %v253 = vld [vmem:[%s1 + $0x210] sm:$0xff]
    %v254 = vld [vmem:[%s1 + $0x218] sm:$0xff]
    %v255 = vld [vmem:[%s1 + $0x220] sm:$0xff]
    %v256 = vld [vmem:[%s1 + $0x228] sm:$0xff]
    %v257 = vld [vmem:[%s1 + $0x230] sm:$0xff]
    %v258 = vld [vmem:[%s1 + $0x238] sm:$0xff]
    %v259 = vld [vmem:[%s1 + $0x240] sm:$0xff]
    %v260 = vld [vmem:[%s1 + $0x248] sm:$0xff]
    %v261 = vld [vmem:[%s1 + $0x250] sm:$0xff]
    %v262 = vld [vmem:[%s1 + $0x258] sm:$0xff]
    %v263 = vld [vmem:[%s1 + $0x260] sm:$0xff]
    %v264 = vld [vmem:[%s1 + $0x268] sm:$0xff]
    %v265 = vld [vmem:[%s1 + $0x270] sm:$0xff]
    %v266 = vld [vmem:[%s1 + $0x278] sm:$0xff]
    %v267 = vld [vmem:[%s1 + $0x280] sm:$0xff]
    %v268 = vld [vmem:[%s1 + $0x288] sm:$0xff]
    %v269 = vld [vmem:[%s1 + $0x290] sm:$0xff]
    %v270 = vld [vmem:[%s1 + $0x298] sm:$0xff]
    %v271 = vld [vmem:[%s1 + $0x2a0] sm:$0xff]
    %v272 = vld [vmem:[%s1 + $0x2a8] sm:$0xff]
    %v273 = vld [vmem:[%s1 + $0x2b0] sm:$0xff]
    %v274 = vld [vmem:[%s1 + $0x2b8] sm:$0xff]
    %v275 = vld [vmem:[%s1 + $0x2c0] sm:$0xff]
    %v276 = vld [vmem:[%s1 + $0x2c8] sm:$0xff]
    %v277 = vld [vmem:[%s1 + $0x2d0] sm:$0xff]
    %v278 = vld [vmem:[%s1 + $0x2d8] sm:$0xff]
    %v279 = vld [vmem:[%s1 + $0x2e0] sm:$0xff]
    %v280 = vld [vmem:[%s1 + $0x2e8] sm:$0xff]
    %v281 = vld [vmem:[%s1 + $0x2f0] sm:$0xff]
    %v282 = vld [vmem:[%s1 + $0x2f8] sm:$0xff]
    %v283 = vld [vmem:[%s1 + $0x300] sm:$0xff]
    %v284 = vld [vmem:[%s1 + $0x308] sm:$0xff]
    %v285 = vld [vmem:[%s1 + $0x310] sm:$0xff]
    %v286 = vld [vmem:[%s1 + $0x318] sm:$0xff]
    %v287 = vld [vmem:[%s1 + $0x320] sm:$0xff]
    %v288 = vld [vmem:[%s1 + $0x328] sm:$0xff]
    %v289 = vld [vmem:[%s1 + $0x330] sm:$0xff]
    %v290 = vld [vmem:[%s1 + $0x338] sm:$0xff]
    %v291 = vld [vmem:[%s1 + $0x340] sm:$0xff]
    %v292 = vld [vmem:[%s1 + $0x348] sm:$0xff]
    %v293 = vld [vmem:[%s1 + $0x350] sm:$0xff]
    %v294 = vld [vmem:[%s1 + $0x358] sm:$0xff]
    %v295 = vld [vmem:[%s1 + $0x360] sm:$0xff]
    %v296 = vld [vmem:[%s1 + $0x368] sm:$0xff]
    %v297 = vld [vmem:[%s1 + $0x370] sm:$0xff]
    %v298 = vld [vmem:[%s1 + $0x378] sm:$0xff]
    %v299 = vld [vmem:[%s1 + $0x380] sm:$0xff]
    %v300 = vld [vmem:[%s1 + $0x388] sm:$0xff]
    %v301 = vld [vmem:[%s1 + $0x390] sm:$0xff]
    %v302 = vld [vmem:[%s1 + $0x398] sm:$0xff]
    %v303 = vld [vmem:[%s1 + $0x3a0] sm:$0xff]
    %v304 = vld [vmem:[%s1 + $0x3a8] sm:$0xff]
    %v305 = vld [vmem:[%s1 + $0x3b0] sm:$0xff]
    %v306 = vld [vmem:[%s1 + $0x3b8] sm:$0xff]
    %v307 = vld [vmem:[%s1 + $0x3c0] sm:$0xff]
    %v308 = vld [vmem:[%s1 + $0x3c8] sm:$0xff]
    %v309 = vld [vmem:[%s1 + $0x3d0] sm:$0xff]
    %v310 = vld [vmem:[%s1 + $0x3d8] sm:$0xff]
    %v311 = vld [vmem:[%s1 + $0x3e0] sm:$0xff]
    %v312 = vld [vmem:[%s1 + $0x3e8] sm:$0xff]
    %v313 = vld [vmem:[%s1 + $0x3f0] sm:$0xff]
    %v314 = vld [vmem:[%s1 + $0x3f8] sm:$0xff]
    %v315 = vld [vmem:[%s1 + $0x400] sm:$0xff]
    %v316 = vld [vmem:[%s1 + $0x408] sm:$0xff]
    %v317 = vld [vmem:[%s1 + $0x410] sm:$0xff]
    %v318 = vld [vmem:[%s1 + $0x418] sm:$0xff]
    %v319 = vld [vmem:[%s1 + $0x420] sm:$0xff]
    %v320 = vld [vmem:[%s1 + $0x428] sm:$0xff]
    %v321 = vld [vmem:[%s1 + $0x430] sm:$0xff]
    %v322 = vld [vmem:[%s1 + $0x438] sm:$0xff]
    %v323 = vld [vmem:[%s1 + $0x440] sm:$0xff]
    %v324 = vld [vmem:[%s1 + $0x448] sm:$0xff]
    %v325 = vld [vmem:[%s1 + $0x450] sm:$0xff]
    %v326 = vld [vmem:[%s1 + $0x458] sm:$0xff]
    %v327 = vld [vmem:[%s1 + $0x460] sm:$0xff]
    %v328 = vld [vmem:[%s1 + $0x468] sm:$0xff]
    %v329 = vld [vmem:[%s1 + $0x470] sm:$0xff]
    %v330 = vld [vmem:[%s1 + $0x478] sm:$0xff]
    %v331 = vld [vmem:[%s1 + $0x480] sm:$0xff]
    %v332 = vld [vmem:[%s1 + $0x488] sm:$0xff]
    %v333 = vld [vmem:[%s1 + $0x490] sm:$0xff]
    %v334 = vld [vmem:[%s1 + $0x498] sm:$0xff]
    %v335 = vld [vmem:[%s1 + $0x4a0] sm:$0xff]
    %v336 = vld [vmem:[%s1 + $0x4a8] sm:$0xff]
    %v337 = vld [vmem:[%s1 + $0x4b0] sm:$0xff]
    %v338 = vld [vmem:[%s1 + $0x4b8] sm:$0xff]
    %v339 = vld [vmem:[%s1 + $0x4c0] sm:$0xff]
    %v340 = vld [vmem:[%s1 + $0x4c8] sm:$0xff]
    %v341 = vld [vmem:[%s1 + $0x4d0] sm:$0xff]
    %v342 = vld [vmem:[%s1 + $0x4d8] sm:$0xff]
    %v343 = vld [vmem:[%s1 + $0x4e0] sm:$0xff]
    %v344 = vld [vmem:[%s1 + $0x4e8] sm:$0xff]
    %v345 = vld [vmem:[%s1 + $0x4f0] sm:$0xff]
    %v346 = vld [vmem:[%s1 + $0x4f8] sm:$0xff]
    %v347 = vld [vmem:[%s1 + $0x500] sm:$0xff]
    %v348 = vld [vmem:[%s1 + $0x508] sm:$0xff]
    %v349 = vld [vmem:[%s1 + $0x510] sm:$0xff]
    %v350 = vld [vmem:[%s1 + $0x518] sm:$0xff]
    %v351 = vld [vmem:[%s1 + $0x520] sm:$0xff]
    %v352 = vld [vmem:[%s1 + $0x528] sm:$0xff]
    %v353 = vld [vmem:[%s1 + $0x530] sm:$0xff]
    %v354 = vld [vmem:[%s1 + $0x538] sm:$0xff]
    %v355 = vld [vmem:[%s1 + $0x540] sm:$0xff]
    %v356 = vld [vmem:[%s1 + $0x548] sm:$0xff]
    %v357 = vld [vmem:[%s1 + $0x550] sm:$0xff]
    %v358 = vld [vmem:[%s1 + $0x558] sm:$0xff]
    %v359 = vld [vmem:[%s1 + $0x560] sm:$0xff]
    %v360 = vld [vmem:[%s1 + $0x568] sm:$0xff]
    %v361 = vld [vmem:[%s1 + $0x570] sm:$0xff]
    %v362 = vld [vmem:[%s1 + $0x578] sm:$0xff]
    %v363 = vld [vmem:[%s1 + $0x580] sm:$0xff]
    %v364 = vld [vmem:[%s1 + $0x588] sm:$0xff]
    %v365 = vld [vmem:[%s1 + $0x590] sm:$0xff]
    %v366 = vld [vmem:[%s1 + $0x598] sm:$0xff]
    %v367 = vld [vmem:[%s1 + $0x5a0] sm:$0xff]
    %v368 = vld [vmem:[%s1 + $0x5a8] sm:$0xff]
    %v369 = vld [vmem:[%s1 + $0x5b0] sm:$0xff]
    %v370 = vld [vmem:[%s1 + $0x5b8] sm:$0xff]
    %v371 = vld [vmem:[%s1 + $0x5c0] sm:$0xff]
    %v372 = vld [vmem:[%s1 + $0x5c8] sm:$0xff]
    %v373 = vld [vmem:[%s1 + $0x5d0] sm:$0xff]
    %v374 = vld [vmem:[%s1 + $0x5d8] sm:$0xff]
    %v375 = vld [vmem:[%s1 + $0x5e0] sm:$0xff]
    %v376 = vld [vmem:[%s1 + $0x5e8] sm:$0xff]
    %v377 = vld [vmem:[%s1 + $0x5f0] sm:$0xff]
    %v378 = vld [vmem:[%s1 + $0x5f8] sm:$0xff]
    %v379 = vld [vmem:[%s2] sm:$0x3]
    %v381 = vlaneseq
    %v382 = vshrl.u32 %v381, 7
    %v383 = vsub.s32 0, %v382
    %v384 = vrot.slane %v379, %v383
    %v385 = vlaneseq
    %v386 = vshrl.u32 %v385, 7
    %v387 = vsub.s32 1, %v386
    %v388 = vrot.slane %v379, %v387
    %391 = vmatprep.subr.mxu0 %v218
    %392 = vmatpush1.msra.mxu0 %v217
    %393 = vmatprep.subr.mxu0 %v216
    %394 = vmatpush1.msra.mxu0 %v215
    %395 = vmatprep.subr.mxu0 %v214
    %396 = vmatpush1.msra.mxu0 %v213
    %397 = vmatprep.subr.mxu0 %v212
    %398 = vmatpush1.msra.mxu0 %v211
    %399 = vmatprep.subr.mxu0 %v210
    %400 = vmatpush1.msra.mxu0 %v209
    %401 = vmatprep.subr.mxu0 %v208
    %402 = vmatpush1.msra.mxu0 %v207
    %403 = vmatprep.subr.mxu0 %v206
    %404 = vmatpush1.msra.mxu0 %v205
    %405 = vmatprep.subr.mxu0 %v204
    %406 = vmatpush1.msra.mxu0 %v203
    %407 = vmatprep.subr.mxu0 %v202
    %408 = vmatpush1.msra.mxu0 %v201
    %409 = vmatprep.subr.mxu0 %v200
    %410 = vmatpush1.msra.mxu0 %v199
    %411 = vmatprep.subr.mxu0 %v198
    %412 = vmatpush1.msra.mxu0 %v197
    %413 = vmatprep.subr.mxu0 %v196
    %414 = vmatpush1.msra.mxu0 %v195
    %415 = vmatprep.subr.mxu0 %v194
    %416 = vmatpush1.msra.mxu0 %v193
    %417 = vmatprep.subr.mxu0 %v192
    %418 = vmatpush1.msra.mxu0 %v191
    %419 = vmatprep.subr.mxu0 %v190
    %420 = vmatpush1.msra.mxu0 %v189
    %421 = vmatprep.subr.mxu0 %v188
    %422 = vmatpush1.msra.mxu0 %v187
    %423 = vmatprep.subr.mxu0 %v250
    %424 = vmatpush2.msra.mxu0 %v249
    %425 = vmatprep.subr.mxu0 %v248
    %426 = vmatpush2.msra.mxu0 %v247
    %427 = vmatprep.subr.mxu0 %v246
    %428 = vmatpush2.msra.mxu0 %v245
    %429 = vmatprep.subr.mxu0 %v244
    %430 = vmatpush2.msra.mxu0 %v243
    %431 = vmatprep.subr.mxu0 %v242
    %432 = vmatpush2.msra.mxu0 %v241
    %433 = vmatprep.subr.mxu0 %v240
    %434 = vmatpush2.msra.mxu0 %v239
    %435 = vmatprep.subr.mxu0 %v238
    %436 = vmatpush2.msra.mxu0 %v237
    %437 = vmatprep.subr.mxu0 %v236
    %438 = vmatpush2.msra.mxu0 %v235
    %439 = vmatprep.subr.mxu0 %v234
    %440 = vmatpush2.msra.mxu0 %v233
    %441 = vmatprep.subr.mxu0 %v232
    %442 = vmatpush2.msra.mxu0 %v231
    %443 = vmatprep.subr.mxu0 %v230
    %444 = vmatpush2.msra.mxu0 %v229
    %445 = vmatprep.subr.mxu0 %v228
    %446 = vmatpush2.msra.mxu0 %v227
    %447 = vmatprep.subr.mxu0 %v226
    %448 = vmatpush2.msra.mxu0 %v225
    %449 = vmatprep.subr.mxu0 %v224
    %450 = vmatpush2.msra.mxu0 %v223
    %451 = vmatprep.subr.mxu0 %v222
    %452 = vmatpush2.msra.mxu0 %v221
    %453 = vmatprep.subr.mxu0 %v220
    %454 = vmatpush2.msra.mxu0 %v219
    %455 = vmatprep.mubr.f32.mxu0 %v155
    %456 = vmatmul.mubr.f32.gmra.mxu0 %v154
    %v457 = vpop.f32.mrf.mxu0
    %v458 = vadd.f32 %v384, %v457
    %v459 = vpop.f32.mrf.mxu0
    %v460 = vadd.f32 %v388, %v459
    %461 = vmatprep.mubr.f32.mxu0 %v157
    %462 = vmatmul.mubr.f32.gmra.mxu0 %v156
    %v463 = vpop.f32.mrf.mxu0
    %v464 = vadd.f32 %v384, %v463
    %v465 = vpop.f32.mrf.mxu0
    %v466 = vadd.f32 %v388, %v465
    %467 = vmatprep.mubr.f32.mxu0 %v159
    %468 = vmatmul.mubr.f32.gmra.mxu0 %v158
    %v469 = vpop.f32.mrf.mxu0
    %v470 = vadd.f32 %v384, %v469
    %v471 = vpop.f32.mrf.mxu0
    %v472 = vadd.f32 %v388, %v471
    %473 = vmatprep.mubr.f32.mxu0 %v161
    %474 = vmatmul.mubr.f32.gmra.mxu0 %v160
    %v475 = vpop.f32.mrf.mxu0
    %v476 = vadd.f32 %v384, %v475
    %v477 = vpop.f32.mrf.mxu0
    %v478 = vadd.f32 %v388, %v477
    %479 = vdwg.mxu0
    %480 = vmatprep.subr.mxu0 %v282
    %481 = vmatpush1.msra.mxu0 %v281
    %482 = vmatprep.subr.mxu0 %v280
    %483 = vmatpush1.msra.mxu0 %v279
    %484 = vmatprep.subr.mxu0 %v278
    %485 = vmatpush1.msra.mxu0 %v277
    %486 = vmatprep.subr.mxu0 %v276
    %487 = vmatpush1.msra.mxu0 %v275
    %488 = vmatprep.subr.mxu0 %v274
    %489 = vmatpush1.msra.mxu0 %v273
    %490 = vmatprep.subr.mxu0 %v272
    %491 = vmatpush1.msra.mxu0 %v271
    %492 = vmatprep.subr.mxu0 %v270
    %493 = vmatpush1.msra.mxu0 %v269
    %494 = vmatprep.subr.mxu0 %v268
    %495 = vmatpush1.msra.mxu0 %v267
    %496 = vmatprep.subr.mxu0 %v266
    %497 = vmatpush1.msra.mxu0 %v265
    %498 = vmatprep.subr.mxu0 %v264
    %499 = vmatpush1.msra.mxu0 %v263
    %500 = vmatprep.subr.mxu0 %v262
    %501 = vmatpush1.msra.mxu0 %v261
    %502 = vmatprep.subr.mxu0 %v260
    %503 = vmatpush1.msra.mxu0 %v259
    %504 = vmatprep.subr.mxu0 %v258
    %505 = vmatpush1.msra.mxu0 %v257
    %506 = vmatprep.subr.mxu0 %v256
    %507 = vmatpush1.msra.mxu0 %v255
    %508 = vmatprep.subr.mxu0 %v254
    %509 = vmatpush1.msra.mxu0 %v253
    %510 = vmatprep.subr.mxu0 %v252
    %511 = vmatpush1.msra.mxu0 %v251
    %512 = vmatprep.subr.mxu0 %v314
    %513 = vmatpush2.msra.mxu0 %v313
    %514 = vmatprep.subr.mxu0 %v312
    %515 = vmatpush2.msra.mxu0 %v311
    %516 = vmatprep.subr.mxu0 %v310
    %517 = vmatpush2.msra.mxu0 %v309
    %518 = vmatprep.subr.mxu0 %v308
    %519 = vmatpush2.msra.mxu0 %v307
    %520 = vmatprep.subr.mxu0 %v306
    %521 = vmatpush2.msra.mxu0 %v305
    %522 = vmatprep.subr.mxu0 %v304
    %523 = vmatpush2.msra.mxu0 %v303
    %524 = vmatprep.subr.mxu0 %v302
    %525 = vmatpush2.msra.mxu0 %v301
    %526 = vmatprep.subr.mxu0 %v300
    %527 = vmatpush2.msra.mxu0 %v299
    %528 = vmatprep.subr.mxu0 %v298
    %529 = vmatpush2.msra.mxu0 %v297
    %530 = vmatprep.subr.mxu0 %v296
    %531 = vmatpush2.msra.mxu0 %v295
    %532 = vmatprep.subr.mxu0 %v294
    %533 = vmatpush2.msra.mxu0 %v293
    %534 = vmatprep.subr.mxu0 %v292
    %535 = vmatpush2.msra.mxu0 %v291
    %536 = vmatprep.subr.mxu0 %v290
    %537 = vmatpush2.msra.mxu0 %v289
    %538 = vmatprep.subr.mxu0 %v288
    %539 = vmatpush2.msra.mxu0 %v287
    %540 = vmatprep.subr.mxu0 %v286
    %541 = vmatpush2.msra.mxu0 %v285
    %542 = vmatprep.subr.mxu0 %v284
    %543 = vmatpush2.msra.mxu0 %v283
    %544 = vmatprep.mubr.f32.mxu0 %v53
    %545 = vmatmul.mubr.f32.gmra.mxu0 %v52
    %v546 = vpop.f32.mrf.mxu0
    %v547 = vadd.f32 %v458, %v546
    %v548 = vpop.f32.mrf.mxu0
    %v549 = vadd.f32 %v460, %v548
    %550 = vmatprep.mubr.f32.mxu0 %v55
    %551 = vmatmul.mubr.f32.gmra.mxu0 %v54
    %v552 = vpop.f32.mrf.mxu0
    %v553 = vadd.f32 %v464, %v552
    %v554 = vpop.f32.mrf.mxu0
    %v555 = vadd.f32 %v466, %v554
    %556 = vmatprep.mubr.f32.mxu0 %v57
    %557 = vmatmul.mubr.f32.gmra.mxu0 %v56
    %v558 = vpop.f32.mrf.mxu0
    %v559 = vadd.f32 %v470, %v558
    %v560 = vpop.f32.mrf.mxu0
    %v561 = vadd.f32 %v472, %v560
    %562 = vmatprep.mubr.f32.mxu0 %v59
    %563 = vmatmul.mubr.f32.gmra.mxu0 %v58
    %v564 = vpop.f32.mrf.mxu0
    %v565 = vadd.f32 %v476, %v564
    %v566 = vpop.f32.mrf.mxu0
    %v567 = vadd.f32 %v478, %v566
    %568 = vdwg.mxu0
    %569 = vmatprep.subr.mxu0 %v346
    %570 = vmatpush1.msra.mxu0 %v345
    %571 = vmatprep.subr.mxu0 %v344
    %572 = vmatpush1.msra.mxu0 %v343
    %573 = vmatprep.subr.mxu0 %v342
    %574 = vmatpush1.msra.mxu0 %v341
    %575 = vmatprep.subr.mxu0 %v340
    %576 = vmatpush1.msra.mxu0 %v339
    %577 = vmatprep.subr.mxu0 %v338
    %578 = vmatpush1.msra.mxu0 %v337
    %579 = vmatprep.subr.mxu0 %v336
    %580 = vmatpush1.msra.mxu0 %v335
    %581 = vmatprep.subr.mxu0 %v334
    %582 = vmatpush1.msra.mxu0 %v333
    %583 = vmatprep.subr.mxu0 %v332
    %584 = vmatpush1.msra.mxu0 %v331
    %585 = vmatprep.subr.mxu0 %v330
    %586 = vmatpush1.msra.mxu0 %v329
    %587 = vmatprep.subr.mxu0 %v328
    %588 = vmatpush1.msra.mxu0 %v327
    %589 = vmatprep.subr.mxu0 %v326
    %590 = vmatpush1.msra.mxu0 %v325
    %591 = vmatprep.subr.mxu0 %v324
    %592 = vmatpush1.msra.mxu0 %v323
    %593 = vmatprep.subr.mxu0 %v322
    %594 = vmatpush1.msra.mxu0 %v321
    %595 = vmatprep.subr.mxu0 %v320
    %596 = vmatpush1.msra.mxu0 %v319
    %597 = vmatprep.subr.mxu0 %v318
    %598 = vmatpush1.msra.mxu0 %v317
    %599 = vmatprep.subr.mxu0 %v316
    %600 = vmatpush1.msra.mxu0 %v315
    %601 = vmatprep.subr.mxu0 %v378
    %602 = vmatpush2.msra.mxu0 %v377
    %603 = vmatprep.subr.mxu0 %v376
    %604 = vmatpush2.msra.mxu0 %v375
    %605 = vmatprep.subr.mxu0 %v374
    %606 = vmatpush2.msra.mxu0 %v373
    %607 = vmatprep.subr.mxu0 %v372
    %608 = vmatpush2.msra.mxu0 %v371
    %609 = vmatprep.subr.mxu0 %v370
    %610 = vmatpush2.msra.mxu0 %v369
    %611 = vmatprep.subr.mxu0 %v368
    %612 = vmatpush2.msra.mxu0 %v367
    %613 = vmatprep.subr.mxu0 %v366
    %614 = vmatpush2.msra.mxu0 %v365
    %615 = vmatprep.subr.mxu0 %v364
    %616 = vmatpush2.msra.mxu0 %v363
    %617 = vmatprep.subr.mxu0 %v362
    %618 = vmatpush2.msra.mxu0 %v361
    %619 = vmatprep.subr.mxu0 %v360
    %620 = vmatpush2.msra.mxu0 %v359
    %621 = vmatprep.subr.mxu0 %v358
    %622 = vmatpush2.msra.mxu0 %v357
    %623 = vmatprep.subr.mxu0 %v356
    %624 = vmatpush2.msra.mxu0 %v355
    %625 = vmatprep.subr.mxu0 %v354
    %626 = vmatpush2.msra.mxu0 %v353
    %627 = vmatprep.subr.mxu0 %v352
    %628 = vmatpush2.msra.mxu0 %v351
    %629 = vmatprep.subr.mxu0 %v350
    %630 = vmatpush2.msra.mxu0 %v349
    %631 = vmatprep.subr.mxu0 %v348
    %632 = vmatpush2.msra.mxu0 %v347
    %633 = vmatprep.mubr.f32.mxu0 %v180
    %634 = vmatmul.mubr.f32.gmra.mxu0 %v179
    %v635 = vpop.f32.mrf.mxu0
    %v636 = vadd.f32 %v547, %v635
    %v637 = vpop.f32.mrf.mxu0
    %v638 = vadd.f32 %v549, %v637
    %639 = vmatprep.mubr.f32.mxu0 %v182
    %640 = vmatmul.mubr.f32.gmra.mxu0 %v181
    %v641 = vpop.f32.mrf.mxu0
    %v642 = vadd.f32 %v553, %v641
    %v643 = vpop.f32.mrf.mxu0
    %v644 = vadd.f32 %v555, %v643
    %645 = vmatprep.mubr.f32.mxu0 %v184
    %646 = vmatmul.mubr.f32.gmra.mxu0 %v183
    %v647 = vpop.f32.mrf.mxu0
    %v648 = vadd.f32 %v559, %v647
    %v649 = vpop.f32.mrf.mxu0
    %v650 = vadd.f32 %v561, %v649
    %651 = vmatprep.mubr.f32.mxu0 %v186
    %652 = vmatmul.mubr.f32.gmra.mxu0 %v185
    %v653 = vpop.f32.mrf.mxu0
    %v654 = vadd.f32 %v565, %v653
    %v655 = vpop.f32.mrf.mxu0
    %v656 = vadd.f32 %v567, %v655
    %657 = vdwg.mxu0
    %v658 = vmax.f32 %v636, 0.0
    %v659 = vmax.f32 %v638, 0.0
    %v660 = vmax.f32 %v642, 0.0
    %v661 = vmax.f32 %v644, 0.0
    %v662 = vmax.f32 %v648, 0.0
    %v663 = vmax.f32 %v650, 0.0
    %v664 = vmax.f32 %v654, 0.0
    %v665 = vmax.f32 %v656, 0.0
    %v666 = vrot.slane %v658, 7
    %v667 = vrot.slane %v659, 7
    %v668 = vrot.slane %v660, 7
    %v669 = vrot.slane %v661, 7
    %v670 = vrot.slane %v662, 7
    %v671 = vrot.slane %v663, 7
    %v672 = vrot.slane %v664, 7
    %v673 = vrot.slane %v665, 7
    %v674 = vsel %vm145, %v670, %v672
    %v675 = vsel %vm145, %v671, %v673
    %v676 = vsel %vm145, %v668, %v670
    %v677 = vsel %vm145, %v669, %v671
    %v678 = vsel %vm145, %v666, %v668
    %v679 = vsel %vm145, %v667, %v669
    %v680 = vsel %vm145, %v672, %v666
    %v681 = vsel %vm145, %v673, %v667
    %v682 = vmul.f32 %v680, %v121
    %v683 = vmul.f32 %v681, %v121
    %v684 = vmul.f32 %v678, %v122
    %v685 = vmul.f32 %v679, %v122
    %v686 = vmul.f32 %v676, %v123
    %v687 = vmul.f32 %v677, %v123
    %v688 = vmul.f32 %v674, %v124
    %v689 = vmul.f32 %v675, %v124
    %v690 = vrot.slane %v658, 1
    %v691 = vrot.slane %v659, 1
    %v692 = vrot.slane %v660, 1
    %v693 = vrot.slane %v661, 1
    %v694 = vrot.slane %v662, 1
    %v695 = vrot.slane %v663, 1
    %v696 = vrot.slane %v664, 1
    %v697 = vrot.slane %v665, 1
    %v698 = vsel %vm170, %v694, %v696
    %v699 = vsel %vm170, %v695, %v697
    %v700 = vsel %vm170, %v692, %v694
    %v701 = vsel %vm170, %v693, %v695
    %v702 = vsel %vm170, %v690, %v692
    %v703 = vsel %vm170, %v691, %v693
    %v704 = vsel %vm170, %v696, %v690
    %v705 = vsel %vm170, %v697, %v691
    %v706 = vmul.f32 %v702, %v133
    %v707 = vmul.f32 %v703, %v133
    %v708 = vmul.f32 %v700, %v134
    %v709 = vmul.f32 %v701, %v134
    %v710 = vmul.f32 %v698, %v135
    %v711 = vmul.f32 %v699, %v135
    %v712 = vmul.f32 %v704, %v136
    %v713 = vmul.f32 %v705, %v136
    %v714 = vld [vmem:[#allocation2] sm:$0xff]
    %v715 = vld [vmem:[#allocation2 + $0x8] sm:$0xff]
    %v716 = vld [vmem:[#allocation2 + $0x10] sm:$0xff]
    %v717 = vld [vmem:[#allocation2 + $0x18] sm:$0xff]
    %v718 = vld [vmem:[#allocation2 + $0x20] sm:$0xff]
    %v719 = vld [vmem:[#allocation2 + $0x28] sm:$0xff]
    %v720 = vld [vmem:[#allocation2 + $0x30] sm:$0xff]
    %v721 = vld [vmem:[#allocation2 + $0x38] sm:$0xff]
    %v722 = vld [vmem:[#allocation2 + $0x40] sm:$0xff]
    %v723 = vld [vmem:[#allocation2 + $0x48] sm:$0xff]
    %v724 = vld [vmem:[#allocation2 + $0x50] sm:$0xff]
    %v725 = vld [vmem:[#allocation2 + $0x58] sm:$0xff]
    %v726 = vld [vmem:[#allocation2 + $0x60] sm:$0xff]
    %v727 = vld [vmem:[#allocation2 + $0x68] sm:$0xff]
    %v728 = vld [vmem:[#allocation2 + $0x70] sm:$0xff]
    %v729 = vld [vmem:[#allocation2 + $0x78] sm:$0xff]
    %v730 = vld [vmem:[#allocation2 + $0x80] sm:$0xff]
    %v731 = vld [vmem:[#allocation2 + $0x88] sm:$0xff]
    %v732 = vld [vmem:[#allocation2 + $0x90] sm:$0xff]
    %v733 = vld [vmem:[#allocation2 + $0x98] sm:$0xff]
    %v734 = vld [vmem:[#allocation2 + $0xa0] sm:$0xff]
    %v735 = vld [vmem:[#allocation2 + $0xa8] sm:$0xff]
    %v736 = vld [vmem:[#allocation2 + $0xb0] sm:$0xff]
    %v737 = vld [vmem:[#allocation2 + $0xb8] sm:$0xff]
    %v738 = vld [vmem:[#allocation2 + $0xc0] sm:$0xff]
    %v739 = vld [vmem:[#allocation2 + $0xc8] sm:$0xff]
    %v740 = vld [vmem:[#allocation2 + $0xd0] sm:$0xff]
    %v741 = vld [vmem:[#allocation2 + $0xd8] sm:$0xff]
    %v742 = vld [vmem:[#allocation2 + $0xe0] sm:$0xff]
    %v743 = vld [vmem:[#allocation2 + $0xe8] sm:$0xff]
    %v744 = vld [vmem:[#allocation2 + $0xf0] sm:$0xff]
    %v745 = vld [vmem:[#allocation2 + $0xf8] sm:$0xff]
    %v746 = vld [vmem:[#allocation2 + $0x100] sm:$0xff]
    %v747 = vld [vmem:[#allocation2 + $0x108] sm:$0xff]
    %v748 = vld [vmem:[#allocation2 + $0x110] sm:$0xff]
    %v749 = vld [vmem:[#allocation2 + $0x118] sm:$0xff]
    %v750 = vld [vmem:[#allocation2 + $0x120] sm:$0xff]
    %v751 = vld [vmem:[#allocation2 + $0x128] sm:$0xff]
    %v752 = vld [vmem:[#allocation2 + $0x130] sm:$0xff]
    %v753 = vld [vmem:[#allocation2 + $0x138] sm:$0xff]
    %v754 = vld [vmem:[#allocation2 + $0x140] sm:$0xff]
    %v755 = vld [vmem:[#allocation2 + $0x148] sm:$0xff]
    %v756 = vld [vmem:[#allocation2 + $0x150] sm:$0xff]
    %v757 = vld [vmem:[#allocation2 + $0x158] sm:$0xff]
    %v758 = vld [vmem:[#allocation2 + $0x160] sm:$0xff]
    %v759 = vld [vmem:[#allocation2 + $0x168] sm:$0xff]
    %v760 = vld [vmem:[#allocation2 + $0x170] sm:$0xff]
    %v761 = vld [vmem:[#allocation2 + $0x178] sm:$0xff]
    %v762 = vld [vmem:[#allocation2 + $0x180] sm:$0xff]
    %v763 = vld [vmem:[#allocation2 + $0x188] sm:$0xff]
    %v764 = vld [vmem:[#allocation2 + $0x190] sm:$0xff]
    %v765 = vld [vmem:[#allocation2 + $0x198] sm:$0xff]
    %v766 = vld [vmem:[#allocation2 + $0x1a0] sm:$0xff]
    %v767 = vld [vmem:[#allocation2 + $0x1a8] sm:$0xff]
    %v768 = vld [vmem:[#allocation2 + $0x1b0] sm:$0xff]
    %v769 = vld [vmem:[#allocation2 + $0x1b8] sm:$0xff]
    %v770 = vld [vmem:[#allocation2 + $0x1c0] sm:$0xff]
    %v771 = vld [vmem:[#allocation2 + $0x1c8] sm:$0xff]
    %v772 = vld [vmem:[#allocation2 + $0x1d0] sm:$0xff]
    %v773 = vld [vmem:[#allocation2 + $0x1d8] sm:$0xff]
    %v774 = vld [vmem:[#allocation2 + $0x1e0] sm:$0xff]
    %v775 = vld [vmem:[#allocation2 + $0x1e8] sm:$0xff]
    %v776 = vld [vmem:[#allocation2 + $0x1f0] sm:$0xff]
    %v777 = vld [vmem:[#allocation2 + $0x1f8] sm:$0xff]
    %v778 = vld [vmem:[#allocation2 + $0x200] sm:$0xff]
    %v779 = vld [vmem:[#allocation2 + $0x208] sm:$0xff]
    %v780 = vld [vmem:[#allocation2 + $0x210] sm:$0xff]
    %v781 = vld [vmem:[#allocation2 + $0x218] sm:$0xff]
    %v782 = vld [vmem:[#allocation2 + $0x220] sm:$0xff]
    %v783 = vld [vmem:[#allocation2 + $0x228] sm:$0xff]
    %v784 = vld [vmem:[#allocation2 + $0x230] sm:$0xff]
    %v785 = vld [vmem:[#allocation2 + $0x238] sm:$0xff]
    %v786 = vld [vmem:[#allocation2 + $0x240] sm:$0xff]
    %v787 = vld [vmem:[#allocation2 + $0x248] sm:$0xff]
    %v788 = vld [vmem:[#allocation2 + $0x250] sm:$0xff]
    %v789 = vld [vmem:[#allocation2 + $0x258] sm:$0xff]
    %v790 = vld [vmem:[#allocation2 + $0x260] sm:$0xff]
    %v791 = vld [vmem:[#allocation2 + $0x268] sm:$0xff]
    %v792 = vld [vmem:[#allocation2 + $0x270] sm:$0xff]
    %v793 = vld [vmem:[#allocation2 + $0x278] sm:$0xff]
    %v794 = vld [vmem:[#allocation2 + $0x280] sm:$0xff]
    %v795 = vld [vmem:[#allocation2 + $0x288] sm:$0xff]
    %v796 = vld [vmem:[#allocation2 + $0x290] sm:$0xff]
    %v797 = vld [vmem:[#allocation2 + $0x298] sm:$0xff]
    %v798 = vld [vmem:[#allocation2 + $0x2a0] sm:$0xff]
    %v799 = vld [vmem:[#allocation2 + $0x2a8] sm:$0xff]
    %v800 = vld [vmem:[#allocation2 + $0x2b0] sm:$0xff]
    %v801 = vld [vmem:[#allocation2 + $0x2b8] sm:$0xff]
    %v802 = vld [vmem:[#allocation2 + $0x2c0] sm:$0xff]
    %v803 = vld [vmem:[#allocation2 + $0x2c8] sm:$0xff]
    %v804 = vld [vmem:[#allocation2 + $0x2d0] sm:$0xff]
    %v805 = vld [vmem:[#allocation2 + $0x2d8] sm:$0xff]
    %v806 = vld [vmem:[#allocation2 + $0x2e0] sm:$0xff]
    %v807 = vld [vmem:[#allocation2 + $0x2e8] sm:$0xff]
    %v808 = vld [vmem:[#allocation2 + $0x2f0] sm:$0xff]
    %v809 = vld [vmem:[#allocation2 + $0x2f8] sm:$0xff]
    %v810 = vld [vmem:[#allocation2 + $0x300] sm:$0xff]
    %v811 = vld [vmem:[#allocation2 + $0x308] sm:$0xff]
    %v812 = vld [vmem:[#allocation2 + $0x310] sm:$0xff]
    %v813 = vld [vmem:[#allocation2 + $0x318] sm:$0xff]
    %v814 = vld [vmem:[#allocation2 + $0x320] sm:$0xff]
    %v815 = vld [vmem:[#allocation2 + $0x328] sm:$0xff]
    %v816 = vld [vmem:[#allocation2 + $0x330] sm:$0xff]
    %v817 = vld [vmem:[#allocation2 + $0x338] sm:$0xff]
    %v818 = vld [vmem:[#allocation2 + $0x340] sm:$0xff]
    %v819 = vld [vmem:[#allocation2 + $0x348] sm:$0xff]
    %v820 = vld [vmem:[#allocation2 + $0x350] sm:$0xff]
    %v821 = vld [vmem:[#allocation2 + $0x358] sm:$0xff]
    %v822 = vld [vmem:[#allocation2 + $0x360] sm:$0xff]
    %v823 = vld [vmem:[#allocation2 + $0x368] sm:$0xff]
    %v824 = vld [vmem:[#allocation2 + $0x370] sm:$0xff]
    %v825 = vld [vmem:[#allocation2 + $0x378] sm:$0xff]
    %v826 = vld [vmem:[#allocation2 + $0x380] sm:$0xff]
    %v827 = vld [vmem:[#allocation2 + $0x388] sm:$0xff]
    %v828 = vld [vmem:[#allocation2 + $0x390] sm:$0xff]
    %v829 = vld [vmem:[#allocation2 + $0x398] sm:$0xff]
    %v830 = vld [vmem:[#allocation2 + $0x3a0] sm:$0xff]
    %v831 = vld [vmem:[#allocation2 + $0x3a8] sm:$0xff]
    %v832 = vld [vmem:[#allocation2 + $0x3b0] sm:$0xff]
    %v833 = vld [vmem:[#allocation2 + $0x3b8] sm:$0xff]
    %v834 = vld [vmem:[#allocation2 + $0x3c0] sm:$0xff]
    %v835 = vld [vmem:[#allocation2 + $0x3c8] sm:$0xff]
    %v836 = vld [vmem:[#allocation2 + $0x3d0] sm:$0xff]
    %v837 = vld [vmem:[#allocation2 + $0x3d8] sm:$0xff]
    %v838 = vld [vmem:[#allocation2 + $0x3e0] sm:$0xff]
    %v839 = vld [vmem:[#allocation2 + $0x3e8] sm:$0xff]
    %v840 = vld [vmem:[#allocation2 + $0x3f0] sm:$0xff]
    %v841 = vld [vmem:[#allocation2 + $0x3f8] sm:$0xff]
    %v842 = vld [vmem:[#allocation2 + $0x400] sm:$0xff]
    %v843 = vld [vmem:[#allocation2 + $0x408] sm:$0xff]
    %v844 = vld [vmem:[#allocation2 + $0x410] sm:$0xff]
    %v845 = vld [vmem:[#allocation2 + $0x418] sm:$0xff]
    %v846 = vld [vmem:[#allocation2 + $0x420] sm:$0xff]
    %v847 = vld [vmem:[#allocation2 + $0x428] sm:$0xff]
    %v848 = vld [vmem:[#allocation2 + $0x430] sm:$0xff]
    %v849 = vld [vmem:[#allocation2 + $0x438] sm:$0xff]
    %v850 = vld [vmem:[#allocation2 + $0x440] sm:$0xff]
    %v851 = vld [vmem:[#allocation2 + $0x448] sm:$0xff]
    %v852 = vld [vmem:[#allocation2 + $0x450] sm:$0xff]
    %v853 = vld [vmem:[#allocation2 + $0x458] sm:$0xff]
    %v854 = vld [vmem:[#allocation2 + $0x460] sm:$0xff]
    %v855 = vld [vmem:[#allocation2 + $0x468] sm:$0xff]
    %v856 = vld [vmem:[#allocation2 + $0x470] sm:$0xff]
    %v857 = vld [vmem:[#allocation2 + $0x478] sm:$0xff]
    %v858 = vld [vmem:[#allocation2 + $0x480] sm:$0xff]
    %v859 = vld [vmem:[#allocation2 + $0x488] sm:$0xff]
    %v860 = vld [vmem:[#allocation2 + $0x490] sm:$0xff]
    %v861 = vld [vmem:[#allocation2 + $0x498] sm:$0xff]
    %v862 = vld [vmem:[#allocation2 + $0x4a0] sm:$0xff]
    %v863 = vld [vmem:[#allocation2 + $0x4a8] sm:$0xff]
    %v864 = vld [vmem:[#allocation2 + $0x4b0] sm:$0xff]
    %v865 = vld [vmem:[#allocation2 + $0x4b8] sm:$0xff]
    %v866 = vld [vmem:[#allocation2 + $0x4c0] sm:$0xff]
    %v867 = vld [vmem:[#allocation2 + $0x4c8] sm:$0xff]
    %v868 = vld [vmem:[#allocation2 + $0x4d0] sm:$0xff]
    %v869 = vld [vmem:[#allocation2 + $0x4d8] sm:$0xff]
    %v870 = vld [vmem:[#allocation2 + $0x4e0] sm:$0xff]
    %v871 = vld [vmem:[#allocation2 + $0x4e8] sm:$0xff]
    %v872 = vld [vmem:[#allocation2 + $0x4f0] sm:$0xff]
    %v873 = vld [vmem:[#allocation2 + $0x4f8] sm:$0xff]
    %v874 = vld [vmem:[#allocation2 + $0x500] sm:$0xff]
    %v875 = vld [vmem:[#allocation2 + $0x508] sm:$0xff]
    %v876 = vld [vmem:[#allocation2 + $0x510] sm:$0xff]
    %v877 = vld [vmem:[#allocation2 + $0x518] sm:$0xff]
    %v878 = vld [vmem:[#allocation2 + $0x520] sm:$0xff]
    %v879 = vld [vmem:[#allocation2 + $0x528] sm:$0xff]
    %v880 = vld [vmem:[#allocation2 + $0x530] sm:$0xff]
    %v881 = vld [vmem:[#allocation2 + $0x538] sm:$0xff]
    %v882 = vld [vmem:[#allocation2 + $0x540] sm:$0xff]
    %v883 = vld [vmem:[#allocation2 + $0x548] sm:$0xff]
    %v884 = vld [vmem:[#allocation2 + $0x550] sm:$0xff]
    %v885 = vld [vmem:[#allocation2 + $0x558] sm:$0xff]
    %v886 = vld [vmem:[#allocation2 + $0x560] sm:$0xff]
    %v887 = vld [vmem:[#allocation2 + $0x568] sm:$0xff]
    %v888 = vld [vmem:[#allocation2 + $0x570] sm:$0xff]
    %v889 = vld [vmem:[#allocation2 + $0x578] sm:$0xff]
    %v890 = vld [vmem:[#allocation2 + $0x580] sm:$0xff]
    %v891 = vld [vmem:[#allocation2 + $0x588] sm:$0xff]
    %v892 = vld [vmem:[#allocation2 + $0x590] sm:$0xff]
    %v893 = vld [vmem:[#allocation2 + $0x598] sm:$0xff]
    %v894 = vld [vmem:[#allocation2 + $0x5a0] sm:$0xff]
    %v895 = vld [vmem:[#allocation2 + $0x5a8] sm:$0xff]
    %v896 = vld [vmem:[#allocation2 + $0x5b0] sm:$0xff]
    %v897 = vld [vmem:[#allocation2 + $0x5b8] sm:$0xff]
    %v898 = vld [vmem:[#allocation2 + $0x5c0] sm:$0xff]
    %v899 = vld [vmem:[#allocation2 + $0x5c8] sm:$0xff]
    %v900 = vld [vmem:[#allocation2 + $0x5d0] sm:$0xff]
    %v901 = vld [vmem:[#allocation2 + $0x5d8] sm:$0xff]
    %v902 = vld [vmem:[#allocation2 + $0x5e0] sm:$0xff]
    %v903 = vld [vmem:[#allocation2 + $0x5e8] sm:$0xff]
    %v904 = vld [vmem:[#allocation2 + $0x5f0] sm:$0xff]
    %v905 = vld [vmem:[#allocation2 + $0x5f8] sm:$0xff]
    %v906 = vld [vmem:[%s4] sm:$0x3]
    %v908 = vlaneseq
    %v909 = vshrl.u32 %v908, 7
    %v910 = vsub.s32 0, %v909
    %v911 = vrot.slane %v906, %v910
    %v912 = vlaneseq
    %v913 = vshrl.u32 %v912, 7
    %v914 = vsub.s32 1, %v913
    %v915 = vrot.slane %v906, %v914
    %918 = vmatprep.subr.mxu0 %v745
    %919 = vmatpush1.msra.mxu0 %v744
    %920 = vmatprep.subr.mxu0 %v743
    %921 = vmatpush1.msra.mxu0 %v742
    %922 = vmatprep.subr.mxu0 %v741
    %923 = vmatpush1.msra.mxu0 %v740
    %924 = vmatprep.subr.mxu0 %v739
    %925 = vmatpush1.msra.mxu0 %v738
    %926 = vmatprep.subr.mxu0 %v737
    %927 = vmatpush1.msra.mxu0 %v736
    %928 = vmatprep.subr.mxu0 %v735
    %929 = vmatpush1.msra.mxu0 %v734
    %930 = vmatprep.subr.mxu0 %v733
    %931 = vmatpush1.msra.mxu0 %v732
    %932 = vmatprep.subr.mxu0 %v731
    %933 = vmatpush1.msra.mxu0 %v730
    %934 = vmatprep.subr.mxu0 %v729
    %935 = vmatpush1.msra.mxu0 %v728
    %936 = vmatprep.subr.mxu0 %v727
    %937 = vmatpush1.msra.mxu0 %v726
    %938 = vmatprep.subr.mxu0 %v725
    %939 = vmatpush1.msra.mxu0 %v724
    %940 = vmatprep.subr.mxu0 %v723
    %941 = vmatpush1.msra.mxu0 %v722
    %942 = vmatprep.subr.mxu0 %v721
    %943 = vmatpush1.msra.mxu0 %v720
    %944 = vmatprep.subr.mxu0 %v719
    %945 = vmatpush1.msra.mxu0 %v718
    %946 = vmatprep.subr.mxu0 %v717
    %947 = vmatpush1.msra.mxu0 %v716
    %948 = vmatprep.subr.mxu0 %v715
    %949 = vmatpush1.msra.mxu0 %v714
    %950 = vmatprep.subr.mxu0 %v777
    %951 = vmatpush2.msra.mxu0 %v776
    %952 = vmatprep.subr.mxu0 %v775
    %953 = vmatpush2.msra.mxu0 %v774
    %954 = vmatprep.subr.mxu0 %v773
    %955 = vmatpush2.msra.mxu0 %v772
    %956 = vmatprep.subr.mxu0 %v771
    %957 = vmatpush2.msra.mxu0 %v770
    %958 = vmatprep.subr.mxu0 %v769
    %959 = vmatpush2.msra.mxu0 %v768
    %960 = vmatprep.subr.mxu0 %v767
    %961 = vmatpush2.msra.mxu0 %v766
    %962 = vmatprep.subr.mxu0 %v765
    %963 = vmatpush2.msra.mxu0 %v764
    %964 = vmatprep.subr.mxu0 %v763
    %965 = vmatpush2.msra.mxu0 %v762
    %966 = vmatprep.subr.mxu0 %v761
    %967 = vmatpush2.msra.mxu0 %v760
    %968 = vmatprep.subr.mxu0 %v759
    %969 = vmatpush2.msra.mxu0 %v758
    %970 = vmatprep.subr.mxu0 %v757
    %971 = vmatpush2.msra.mxu0 %v756
    %972 = vmatprep.subr.mxu0 %v755
    %973 = vmatpush2.msra.mxu0 %v754
    %974 = vmatprep.subr.mxu0 %v753
    %975 = vmatpush2.msra.mxu0 %v752
    %976 = vmatprep.subr.mxu0 %v751
    %977 = vmatpush2.msra.mxu0 %v750
    %978 = vmatprep.subr.mxu0 %v749
    %979 = vmatpush2.msra.mxu0 %v748
    %980 = vmatprep.subr.mxu0 %v747
    %981 = vmatpush2.msra.mxu0 %v746
    %982 = vmatprep.mubr.f32.mxu0 %v683
    %983 = vmatmul.mubr.f32.gmra.mxu0 %v682
    %v984 = vpop.f32.mrf.mxu0
    %v985 = vadd.f32 %v911, %v984
    %v986 = vpop.f32.mrf.mxu0
    %v987 = vadd.f32 %v915, %v986
    %988 = vmatprep.mubr.f32.mxu0 %v685
    %989 = vmatmul.mubr.f32.gmra.mxu0 %v684
    %v990 = vpop.f32.mrf.mxu0
    %v991 = vadd.f32 %v911, %v990
    %v992 = vpop.f32.mrf.mxu0
    %v993 = vadd.f32 %v915, %v992
    %994 = vmatprep.mubr.f32.mxu0 %v687
    %995 = vmatmul.mubr.f32.gmra.mxu0 %v686
    %v996 = vpop.f32.mrf.mxu0
    %v997 = vadd.f32 %v911, %v996
    %v998 = vpop.f32.mrf.mxu0
    %v999 = vadd.f32 %v915, %v998
    %1000 = vmatprep.mubr.f32.mxu0 %v689
    %1001 = vmatmul.mubr.f32.gmra.mxu0 %v688
    %v1002 = vpop.f32.mrf.mxu0
    %v1003 = vadd.f32 %v911, %v1002
    %v1004 = vpop.f32.mrf.mxu0
    %v1005 = vadd.f32 %v915, %v1004
    %1006 = vdwg.mxu0
    %1007 = vmatprep.subr.mxu0 %v809
    %1008 = vmatpush1.msra.mxu0 %v808
    %1009 = vmatprep.subr.mxu0 %v807
    %1010 = vmatpush1.msra.mxu0 %v806
    %1011 = vmatprep.subr.mxu0 %v805
    %1012 = vmatpush1.msra.mxu0 %v804
    %1013 = vmatprep.subr.mxu0 %v803
    %1014 = vmatpush1.msra.mxu0 %v802
    %1015 = vmatprep.subr.mxu0 %v801
    %1016 = vmatpush1.msra.mxu0 %v800
    %1017 = vmatprep.subr.mxu0 %v799
    %1018 = vmatpush1.msra.mxu0 %v798
    %1019 = vmatprep.subr.mxu0 %v797
    %1020 = vmatpush1.msra.mxu0 %v796
    %1021 = vmatprep.subr.mxu0 %v795
    %1022 = vmatpush1.msra.mxu0 %v794
    %1023 = vmatprep.subr.mxu0 %v793
    %1024 = vmatpush1.msra.mxu0 %v792
    %1025 = vmatprep.subr.mxu0 %v791
    %1026 = vmatpush1.msra.mxu0 %v790
    %1027 = vmatprep.subr.mxu0 %v789
    %1028 = vmatpush1.msra.mxu0 %v788
    %1029 = vmatprep.subr.mxu0 %v787
    %1030 = vmatpush1.msra.mxu0 %v786
    %1031 = vmatprep.subr.mxu0 %v785
    %1032 = vmatpush1.msra.mxu0 %v784
    %1033 = vmatprep.subr.mxu0 %v783
    %1034 = vmatpush1.msra.mxu0 %v782
    %1035 = vmatprep.subr.mxu0 %v781
    %1036 = vmatpush1.msra.mxu0 %v780
    %1037 = vmatprep.subr.mxu0 %v779
    %1038 = vmatpush1.msra.mxu0 %v778
    %1039 = vmatprep.subr.mxu0 %v841
    %1040 = vmatpush2.msra.mxu0 %v840
    %1041 = vmatprep.subr.mxu0 %v839
    %1042 = vmatpush2.msra.mxu0 %v838
    %1043 = vmatprep.subr.mxu0 %v837
    %1044 = vmatpush2.msra.mxu0 %v836
    %1045 = vmatprep.subr.mxu0 %v835
    %1046 = vmatpush2.msra.mxu0 %v834
    %1047 = vmatprep.subr.mxu0 %v833
    %1048 = vmatpush2.msra.mxu0 %v832
    %1049 = vmatprep.subr.mxu0 %v831
    %1050 = vmatpush2.msra.mxu0 %v830
    %1051 = vmatprep.subr.mxu0 %v829
    %1052 = vmatpush2.msra.mxu0 %v828
    %1053 = vmatprep.subr.mxu0 %v827
    %1054 = vmatpush2.msra.mxu0 %v826
    %1055 = vmatprep.subr.mxu0 %v825
    %1056 = vmatpush2.msra.mxu0 %v824
    %1057 = vmatprep.subr.mxu0 %v823
    %1058 = vmatpush2.msra.mxu0 %v822
    %1059 = vmatprep.subr.mxu0 %v821
    %1060 = vmatpush2.msra.mxu0 %v820
    %1061 = vmatprep.subr.mxu0 %v819
    %1062 = vmatpush2.msra.mxu0 %v818
    %1063 = vmatprep.subr.mxu0 %v817
    %1064 = vmatpush2.msra.mxu0 %v816
    %1065 = vmatprep.subr.mxu0 %v815
    %1066 = vmatpush2.msra.mxu0 %v814
    %1067 = vmatprep.subr.mxu0 %v813
    %1068 = vmatpush2.msra.mxu0 %v812
    %1069 = vmatprep.subr.mxu0 %v811
    %1070 = vmatpush2.msra.mxu0 %v810
    %1071 = vmatprep.mubr.f32.mxu0 %v659
    %1072 = vmatmul.mubr.f32.gmra.mxu0 %v658
    %v1073 = vpop.f32.mrf.mxu0
    %v1074 = vadd.f32 %v985, %v1073
    %v1075 = vpop.f32.mrf.mxu0
    %v1076 = vadd.f32 %v987, %v1075
    %1077 = vmatprep.mubr.f32.mxu0 %v661
    %1078 = vmatmul.mubr.f32.gmra.mxu0 %v660
    %v1079 = vpop.f32.mrf.mxu0
    %v1080 = vadd.f32 %v991, %v1079
    %v1081 = vpop.f32.mrf.mxu0
    %v1082 = vadd.f32 %v993, %v1081
    %1083 = vmatprep.mubr.f32.mxu0 %v663
    %1084 = vmatmul.mubr.f32.gmra.mxu0 %v662
    %v1085 = vpop.f32.mrf.mxu0
    %v1086 = vadd.f32 %v997, %v1085
    %v1087 = vpop.f32.mrf.mxu0
    %v1088 = vadd.f32 %v999, %v1087
    %1089 = vmatprep.mubr.f32.mxu0 %v665
    %1090 = vmatmul.mubr.f32.gmra.mxu0 %v664
    %v1091 = vpop.f32.mrf.mxu0
    %v1092 = vadd.f32 %v1003, %v1091
    %v1093 = vpop.f32.mrf.mxu0
    %v1094 = vadd.f32 %v1005, %v1093
    %1095 = vdwg.mxu0
    %1096 = vmatprep.subr.mxu0 %v873
    %1097 = vmatpush1.msra.mxu0 %v872
    %1098 = vmatprep.subr.mxu0 %v871
    %1099 = vmatpush1.msra.mxu0 %v870
    %1100 = vmatprep.subr.mxu0 %v869
    %1101 = vmatpush1.msra.mxu0 %v868
    %1102 = vmatprep.subr.mxu0 %v867
    %1103 = vmatpush1.msra.mxu0 %v866
    %1104 = vmatprep.subr.mxu0 %v865
    %1105 = vmatpush1.msra.mxu0 %v864
    %1106 = vmatprep.subr.mxu0 %v863
    %1107 = vmatpush1.msra.mxu0 %v862
    %1108 = vmatprep.subr.mxu0 %v861
    %1109 = vmatpush1.msra.mxu0 %v860
    %1110 = vmatprep.subr.mxu0 %v859
    %1111 = vmatpush1.msra.mxu0 %v858
    %1112 = vmatprep.subr.mxu0 %v857
    %1113 = vmatpush1.msra.mxu0 %v856
    %1114 = vmatprep.subr.mxu0 %v855
    %1115 = vmatpush1.msra.mxu0 %v854
    %1116 = vmatprep.subr.mxu0 %v853
    %1117 = vmatpush1.msra.mxu0 %v852
    %1118 = vmatprep.subr.mxu0 %v851
    %1119 = vmatpush1.msra.mxu0 %v850
    %1120 = vmatprep.subr.mxu0 %v849
    %1121 = vmatpush1.msra.mxu0 %v848
    %1122 = vmatprep.subr.mxu0 %v847
    %1123 = vmatpush1.msra.mxu0 %v846
    %1124 = vmatprep.subr.mxu0 %v845
    %1125 = vmatpush1.msra.mxu0 %v844
    %1126 = vmatprep.subr.mxu0 %v843
    %1127 = vmatpush1.msra.mxu0 %v842
    %1128 = vmatprep.subr.mxu0 %v905
    %1129 = vmatpush2.msra.mxu0 %v904
    %1130 = vmatprep.subr.mxu0 %v903
    %1131 = vmatpush2.msra.mxu0 %v902
    %1132 = vmatprep.subr.mxu0 %v901
    %1133 = vmatpush2.msra.mxu0 %v900
    %1134 = vmatprep.subr.mxu0 %v899
    %1135 = vmatpush2.msra.mxu0 %v898
    %1136 = vmatprep.subr.mxu0 %v897
    %1137 = vmatpush2.msra.mxu0 %v896
    %1138 = vmatprep.subr.mxu0 %v895
    %1139 = vmatpush2.msra.mxu0 %v894
    %1140 = vmatprep.subr.mxu0 %v893
    %1141 = vmatpush2.msra.mxu0 %v892
    %1142 = vmatprep.subr.mxu0 %v891
    %1143 = vmatpush2.msra.mxu0 %v890
    %1144 = vmatprep.subr.mxu0 %v889
    %1145 = vmatpush2.msra.mxu0 %v888
    %1146 = vmatprep.subr.mxu0 %v887
    %1147 = vmatpush2.msra.mxu0 %v886
    %1148 = vmatprep.subr.mxu0 %v885
    %1149 = vmatpush2.msra.mxu0 %v884
    %1150 = vmatprep.subr.mxu0 %v883
    %1151 = vmatpush2.msra.mxu0 %v882
    %1152 = vmatprep.subr.mxu0 %v881
    %1153 = vmatpush2.msra.mxu0 %v880
    %1154 = vmatprep.subr.mxu0 %v879
    %1155 = vmatpush2.msra.mxu0 %v878
    %1156 = vmatprep.subr.mxu0 %v877
    %1157 = vmatpush2.msra.mxu0 %v876
    %1158 = vmatprep.subr.mxu0 %v875
    %1159 = vmatpush2.msra.mxu0 %v874
    %1160 = vmatprep.mubr.f32.mxu0 %v707
    %1161 = vmatmul.mubr.f32.gmra.mxu0 %v706
    %v1162 = vpop.f32.mrf.mxu0
    %v1163 = vadd.f32 %v1074, %v1162
    %v1164 = vpop.f32.mrf.mxu0
    %v1165 = vadd.f32 %v1076, %v1164
    %1166 = vmatprep.mubr.f32.mxu0 %v709
    %1167 = vmatmul.mubr.f32.gmra.mxu0 %v708
    %v1168 = vpop.f32.mrf.mxu0
    %v1169 = vadd.f32 %v1080, %v1168
    %v1170 = vpop.f32.mrf.mxu0
    %v1171 = vadd.f32 %v1082, %v1170
    %1172 = vmatprep.mubr.f32.mxu0 %v711
    %1173 = vmatmul.mubr.f32.gmra.mxu0 %v710
    %v1174 = vpop.f32.mrf.mxu0
    %v1175 = vadd.f32 %v1086, %v1174
    %v1176 = vpop.f32.mrf.mxu0
    %v1177 = vadd.f32 %v1088, %v1176
    %1178 = vmatprep.mubr.f32.mxu0 %v713
    %1179 = vmatmul.mubr.f32.gmra.mxu0 %v712
    %v1180 = vpop.f32.mrf.mxu0
    %v1181 = vadd.f32 %v1092, %v1180
    %v1182 = vpop.f32.mrf.mxu0
    %v1183 = vadd.f32 %v1094, %v1182
    %1184 = vdwg.mxu0
    %v1185 = vld [vmem:[%s9] sm:$0x3]
    %vm1186 = vcmask 261120
    %v1188 = vsel %vm1186, %v1185, 0
    %1190 = vmatprep.subr.mxu0 0.0
    %1191 = vmatpush1.msra.mxu0 0.0
    %1192 = vmatprep.subr.mxu0 0.0
    %1193 = vmatpush1.msra.mxu0 0.0
    %1194 = vmatprep.subr.mxu0 0.0
    %1195 = vmatpush1.msra.mxu0 0.0
    %1196 = vmatprep.subr.mxu0 0.0
    %1197 = vmatpush1.msra.mxu0 0.0
    %1198 = vmatprep.subr.mxu0 0.0
    %1199 = vmatpush1.msra.mxu0 0.0
    %1200 = vmatprep.subr.mxu0 0.0
    %1201 = vmatpush1.msra.mxu0 0.0
    %1202 = vmatprep.subr.mxu0 0.0
    %1203 = vmatpush1.msra.mxu0 0.0
    %1204 = vmatprep.subr.mxu0 0.0
    %1205 = vmatpush1.msra.mxu0 0.0
    %1206 = vmatprep.subr.mxu0 0.0
    %1207 = vmatpush1.msra.mxu0 0.0
    %1208 = vmatprep.subr.mxu0 0.0
    %1209 = vmatpush1.msra.mxu0 0.0
    %1210 = vmatprep.subr.mxu0 0.0
    %1211 = vmatpush1.msra.mxu0 0.0
    %1212 = vmatprep.subr.mxu0 0.0
    %1213 = vmatpush1.msra.mxu0 0.0
    %1214 = vmatprep.subr.mxu0 %v1183
    %1215 = vmatpush1.msra.mxu0 %v1181
    %1216 = vmatprep.subr.mxu0 %v1177
    %1217 = vmatpush1.msra.mxu0 %v1175
    %1218 = vmatprep.subr.mxu0 %v1171
    %1219 = vmatpush1.msra.mxu0 %v1169
    %1220 = vmatprep.subr.mxu0 %v1165
    %1221 = vmatpush1.msra.mxu0 %v1163
    %1222 = vmatprep.subr.mxu0 0.0
    %1223 = vmatpush2.msra.mxu0 0.0
    %1224 = vmatprep.subr.mxu0 0.0
    %1225 = vmatpush2.msra.mxu0 0.0
    %1226 = vmatprep.subr.mxu0 0.0
    %1227 = vmatpush2.msra.mxu0 0.0
    %1228 = vmatprep.subr.mxu0 0.0
    %1229 = vmatpush2.msra.mxu0 0.0
    %1230 = vmatprep.subr.mxu0 0.0
    %1231 = vmatpush2.msra.mxu0 0.0
    %1232 = vmatprep.subr.mxu0 0.0
    %1233 = vmatpush2.msra.mxu0 0.0
    %1234 = vmatprep.subr.mxu0 0.0
    %1235 = vmatpush2.msra.mxu0 0.0
    %1236 = vmatprep.subr.mxu0 0.0
    %1237 = vmatpush2.msra.mxu0 0.0
    %1238 = vmatprep.subr.mxu0 0.0
    %1239 = vmatpush2.msra.mxu0 0.0
    %1240 = vmatprep.subr.mxu0 0.0
    %1241 = vmatpush2.msra.mxu0 0.0
    %1242 = vmatprep.subr.mxu0 0.0
    %1243 = vmatpush2.msra.mxu0 0.0
    %1244 = vmatprep.subr.mxu0 0.0
    %1245 = vmatpush2.msra.mxu0 0.0
    %1246 = vmatprep.subr.mxu0 0.0
    %1247 = vmatpush2.msra.mxu0 0.0
    %1248 = vmatprep.subr.mxu0 0.0
    %1249 = vmatpush2.msra.mxu0 0.0
    %1250 = vmatprep.subr.mxu0 0.0
    %1251 = vmatpush2.msra.mxu0 0.0
    %1252 = vmatprep.subr.mxu0 0.0
    %1253 = vmatpush2.msra.mxu0 0.0
    %1254 = vmatprep.mubr.f32.mxu0 0.0
    %1255 = vmatmul.mubr.f32.gmra.mxu0 %v1188
    %v1256 = vpop.f32.mrf.mxu0
    %v1257 = vadd.f32 0.0, %v1256
    %v1258 = vpop.f32.mrf.mxu0
    %v1259 = vadd.f32 0.0, %v1258
    %1260 = vdwg.mxu0
    %v1261 = vld [vmem:[%s5] sm:$0xff]
    %v1262 = vld [vmem:[%s5 + $0x8] sm:$0xff]
    %v1263 = vld [vmem:[%s5 + $0x10] sm:$0xff]
    %v1264 = vld [vmem:[%s5 + $0x18] sm:$0xff]
    %v1265 = vld [vmem:[%s5 + $0x20] sm:$0xff]
    %v1266 = vld [vmem:[%s5 + $0x28] sm:$0xff]
    %v1267 = vld [vmem:[%s5 + $0x30] sm:$0xff]
    %v1268 = vld [vmem:[%s5 + $0x38] sm:$0xff]
    %v1269 = vld [vmem:[%s5 + $0x40] sm:$0xff]
    %v1270 = vld [vmem:[%s5 + $0x48] sm:$0xff]
    %v1271 = vld [vmem:[%s5 + $0x50] sm:$0xff]
    %v1272 = vld [vmem:[%s5 + $0x58] sm:$0xff]
    %v1273 = vld [vmem:[%s5 + $0x60] sm:$0xff]
    %v1274 = vld [vmem:[%s5 + $0x68] sm:$0xff]
    %v1275 = vld [vmem:[%s5 + $0x70] sm:$0xff]
    %v1276 = vld [vmem:[%s5 + $0x78] sm:$0xff]
    %v1277 = vld [vmem:[%s5 + $0x80] sm:$0xff]
    %v1278 = vld [vmem:[%s5 + $0x88] sm:$0xff]
    %v1279 = vld [vmem:[%s5 + $0x90] sm:$0xff]
    %v1280 = vld [vmem:[%s5 + $0x98] sm:$0xff]
    %v1281 = vld [vmem:[%s5 + $0xa0] sm:$0xff]
    %v1282 = vld [vmem:[%s5 + $0xa8] sm:$0xff]
    %v1283 = vld [vmem:[%s5 + $0xb0] sm:$0xff]
    %v1284 = vld [vmem:[%s5 + $0xb8] sm:$0xff]
    %v1285 = vld [vmem:[%s5 + $0xc0] sm:$0xff]
    %v1286 = vld [vmem:[%s5 + $0xc8] sm:$0xff]
    %v1287 = vld [vmem:[%s5 + $0xd0] sm:$0xff]
    %v1288 = vld [vmem:[%s5 + $0xd8] sm:$0xff]
    %v1289 = vld [vmem:[%s5 + $0xe0] sm:$0xff]
    %v1290 = vld [vmem:[%s5 + $0xe8] sm:$0xff]
    %v1291 = vld [vmem:[%s5 + $0xf0] sm:$0xff]
    %v1292 = vld [vmem:[%s5 + $0xf8] sm:$0xff]
    %v1293 = vld [vmem:[%s6] sm:$0x1]
    %v1295 = vlaneseq
    %v1296 = vshrl.u32 %v1295, 7
    %v1297 = vsub.s32 0, %v1296
    %v1298 = vrot.slane %v1293, %v1297
    %1300 = vmatprep.subr.mxu0 0.0
    %1301 = vmatpush1.msra.mxu0 %v1276
    %1302 = vmatprep.subr.mxu0 0.0
    %1303 = vmatpush1.msra.mxu0 %v1275
    %1304 = vmatprep.subr.mxu0 0.0
    %1305 = vmatpush1.msra.mxu0 %v1274
    %1306 = vmatprep.subr.mxu0 0.0
    %1307 = vmatpush1.msra.mxu0 %v1273
    %1308 = vmatprep.subr.mxu0 0.0
    %1309 = vmatpush1.msra.mxu0 %v1272
    %1310 = vmatprep.subr.mxu0 0.0
    %1311 = vmatpush1.msra.mxu0 %v1271
    %1312 = vmatprep.subr.mxu0 0.0
    %1313 = vmatpush1.msra.mxu0 %v1270
    %1314 = vmatprep.subr.mxu0 0.0
    %1315 = vmatpush1.msra.mxu0 %v1269
    %1316 = vmatprep.subr.mxu0 0.0
    %1317 = vmatpush1.msra.mxu0 %v1268
    %1318 = vmatprep.subr.mxu0 0.0
    %1319 = vmatpush1.msra.mxu0 %v1267
    %1320 = vmatprep.subr.mxu0 0.0
    %1321 = vmatpush1.msra.mxu0 %v1266
    %1322 = vmatprep.subr.mxu0 0.0
    %1323 = vmatpush1.msra.mxu0 %v1265
    %1324 = vmatprep.subr.mxu0 0.0
    %1325 = vmatpush1.msra.mxu0 %v1264
    %1326 = vmatprep.subr.mxu0 0.0
    %1327 = vmatpush1.msra.mxu0 %v1263
    %1328 = vmatprep.subr.mxu0 0.0
    %1329 = vmatpush1.msra.mxu0 %v1262
    %1330 = vmatprep.subr.mxu0 0.0
    %1331 = vmatpush1.msra.mxu0 %v1261
    %1332 = vmatprep.subr.mxu0 0.0
    %1333 = vmatpush2.msra.mxu0 %v1292
    %1334 = vmatprep.subr.mxu0 0.0
    %1335 = vmatpush2.msra.mxu0 %v1291
    %1336 = vmatprep.subr.mxu0 0.0
    %1337 = vmatpush2.msra.mxu0 %v1290
    %1338 = vmatprep.subr.mxu0 0.0
    %1339 = vmatpush2.msra.mxu0 %v1289
    %1340 = vmatprep.subr.mxu0 0.0
    %1341 = vmatpush2.msra.mxu0 %v1288
    %1342 = vmatprep.subr.mxu0 0.0
    %1343 = vmatpush2.msra.mxu0 %v1287
    %1344 = vmatprep.subr.mxu0 0.0
    %1345 = vmatpush2.msra.mxu0 %v1286
    %1346 = vmatprep.subr.mxu0 0.0
    %1347 = vmatpush2.msra.mxu0 %v1285
    %1348 = vmatprep.subr.mxu0 0.0
    %1349 = vmatpush2.msra.mxu0 %v1284
    %1350 = vmatprep.subr.mxu0 0.0
    %1351 = vmatpush2.msra.mxu0 %v1283
    %1352 = vmatprep.subr.mxu0 0.0
    %1353 = vmatpush2.msra.mxu0 %v1282
    %1354 = vmatprep.subr.mxu0 0.0
    %1355 = vmatpush2.msra.mxu0 %v1281
    %1356 = vmatprep.subr.mxu0 0.0
    %1357 = vmatpush2.msra.mxu0 %v1280
    %1358 = vmatprep.subr.mxu0 0.0
    %1359 = vmatpush2.msra.mxu0 %v1279
    %1360 = vmatprep.subr.mxu0 0.0
    %1361 = vmatpush2.msra.mxu0 %v1278
    %1362 = vmatprep.subr.mxu0 0.0
    %1363 = vmatpush2.msra.mxu0 %v1277
    %1364 = vmatprep.mubr.f32.mxu0 %v1259
    %1365 = vmatmul.mubr.f32.gmra.mxu0 %v1257
    %v1366 = vpop.f32.mrf.mxu0
    %v1367 = vadd.f32 %v1298, %v1366
    %v1368 = vpop.f32.mrf.mxu0
    %1369 = vdwg.mxu0
    %v1370 = vmax.f32 %v1367, 0.0
    %v1371 = vld [vmem:[%s7] sm:$0xff]
    %v1372 = vld [vmem:[%s8] sm:$0x3]
    %v1374 = vlaneseq
    %v1375 = vshrl.u32 %v1374, 7
    %v1376 = vsub.s32 0, %v1375
    %v1377 = vrot.slane %v1372, %v1376
    %v1378 = vlaneseq
    %v1379 = vshrl.u32 %v1378, 7
    %v1380 = vsub.s32 1, %v1379
    %v1381 = vrot.slane %v1372, %v1380
    %v1385 = vcombine.high %v1371, %v1371
    %vm1386 = vcmask 31744
    %v1388 = vsel %vm1386, %v1370, 0
    %vm1390 = vcmask 1043456
    %v1391 = vsel %vm1390, %v1371, 0
    %v1393 = vsel %vm1390, %v1385, 0
    %1395 = vmatprep.subr.mxu0 0.0
    %1396 = vmatpush1.msra.mxu0 0.0
    %1397 = vmatprep.subr.mxu0 0.0
    %1398 = vmatpush1.msra.mxu0 0.0
    %1399 = vmatprep.subr.mxu0 0.0
    %1400 = vmatpush1.msra.mxu0 0.0
    %1401 = vmatprep.subr.mxu0 0.0
    %1402 = vmatpush1.msra.mxu0 0.0
    %1403 = vmatprep.subr.mxu0 0.0
    %1404 = vmatpush1.msra.mxu0 0.0
    %1405 = vmatprep.subr.mxu0 0.0
    %1406 = vmatpush1.msra.mxu0 0.0
    %1407 = vmatprep.subr.mxu0 0.0
    %1408 = vmatpush1.msra.mxu0 0.0
    %1409 = vmatprep.subr.mxu0 0.0
    %1410 = vmatpush1.msra.mxu0 0.0
    %1411 = vmatprep.subr.mxu0 0.0
    %1412 = vmatpush1.msra.mxu0 0.0
    %1413 = vmatprep.subr.mxu0 0.0
    %1414 = vmatpush1.msra.mxu0 0.0
    %1415 = vmatprep.subr.mxu0 0.0
    %1416 = vmatpush1.msra.mxu0 0.0
    %1417 = vmatprep.subr.mxu0 0.0
    %1418 = vmatpush1.msra.mxu0 0.0
    %1419 = vmatprep.subr.mxu0 0.0
    %1420 = vmatpush1.msra.mxu0 0.0
    %1421 = vmatprep.subr.mxu0 0.0
    %1422 = vmatpush1.msra.mxu0 0.0
    %1423 = vmatprep.subr.mxu0 0.0
    %1424 = vmatpush1.msra.mxu0 0.0
    %1425 = vmatprep.subr.mxu0 %v1393
    %1426 = vmatpush1.msra.mxu0 %v1391
    %1427 = vmatprep.subr.mxu0 0.0
    %1428 = vmatpush2.msra.mxu0 0.0
    %1429 = vmatprep.subr.mxu0 0.0
    %1430 = vmatpush2.msra.mxu0 0.0
    %1431 = vmatprep.subr.mxu0 0.0
    %1432 = vmatpush2.msra.mxu0 0.0
    %1433 = vmatprep.subr.mxu0 0.0
    %1434 = vmatpush2.msra.mxu0 0.0
    %1435 = vmatprep.subr.mxu0 0.0
    %1436 = vmatpush2.msra.mxu0 0.0
    %1437 = vmatprep.subr.mxu0 0.0
    %1438 = vmatpush2.msra.mxu0 0.0
    %1439 = vmatprep.subr.mxu0 0.0
    %1440 = vmatpush2.msra.mxu0 0.0
    %1441 = vmatprep.subr.mxu0 0.0
    %1442 = vmatpush2.msra.mxu0 0.0
    %1443 = vmatprep.subr.mxu0 0.0
    %1444 = vmatpush2.msra.mxu0 0.0
    %1445 = vmatprep.subr.mxu0 0.0
    %1446 = vmatpush2.msra.mxu0 0.0
    %1447 = vmatprep.subr.mxu0 0.0
    %1448 = vmatpush2.msra.mxu0 0.0
    %1449 = vmatprep.subr.mxu0 0.0
    %1450 = vmatpush2.msra.mxu0 0.0
    %1451 = vmatprep.subr.mxu0 0.0
    %1452 = vmatpush2.msra.mxu0 0.0
    %1453 = vmatprep.subr.mxu0 0.0
    %1454 = vmatpush2.msra.mxu0 0.0
    %1455 = vmatprep.subr.mxu0 0.0
    %1456 = vmatpush2.msra.mxu0 0.0
    %1457 = vmatprep.subr.mxu0 0.0
    %1458 = vmatpush2.msra.mxu0 0.0
    %1459 = vmatprep.mubr.f32.mxu0 0.0
    %1460 = vmatmul.mubr.f32.gmra.mxu0 %v1388
    %v1461 = vpop.f32.mrf.mxu0
    %v1462 = vadd.f32 %v1377, %v1461
    %v1463 = vpop.f32.mrf.mxu0
    %v1464 = vadd.f32 %v1381, %v1463
    %1465 = vdwg.mxu0
    %v1466 = vxor.u32 %v1462, 2147483648
    %v1467 = vxor.u32 %v1464, 2147483648
    %v1468 = vmul.f32 %v1466, 1.442695
    %v1469 = vpow.pop %v1468
    %v1470 = vmul.f32 %v1467, 1.442695
    %v1471 = vpow.pop %v1470
    %v1472 = vadd.f32 %v1469, 1.0
    %v1473 = vadd.f32 %v1471, 1.0
    %v1474 = vrcp.pop %v1472
    %v1475 = vmul.f32 1.0, %v1474
    %v1476 = vrcp.pop %v1473
    %v1477 = vmul.f32 1.0, %v1476
    %v1478 = vld [vmem:[%s10] sm:$0xff]
    %v1479 = vld [vmem:[%s10 + $0x8] sm:$0xff]
    %v1480 = vld [vmem:[%s10 + $0x10] sm:$0xff]
    %v1481 = vld [vmem:[%s10 + $0x18] sm:$0xff]
    %vm1482 = vcmask 15360
    %v1484 = vsel %vm1482, %v1478, 0
    %v1487 = vsel %vm1482, %v1479, 0
    %v1490 = vsel %vm1482, %v1480, 0
    %v1493 = vsel %vm1482, %v1481, 0
    %vm1495 = vcmask 1041408
    %v1497 = vsel %vm1495, %v1475, 0
    %v1500 = vsel %vm1495, %v1477, 0
    %1502 = vmatprep.subr.mxu0 0.0
    %1503 = vmatpush1.msra.mxu0 0.0
    %1504 = vmatprep.subr.mxu0 0.0
    %1505 = vmatpush1.msra.mxu0 0.0
    %1506 = vmatprep.subr.mxu0 0.0
    %1507 = vmatpush1.msra.mxu0 0.0
    %1508 = vmatprep.subr.mxu0 0.0
    %1509 = vmatpush1.msra.mxu0 0.0
    %1510 = vmatprep.subr.mxu0 0.0
    %1511 = vmatpush1.msra.mxu0 0.0
    %1512 = vmatprep.subr.mxu0 0.0
    %1513 = vmatpush1.msra.mxu0 0.0
    %1514 = vmatprep.subr.mxu0 0.0
    %1515 = vmatpush1.msra.mxu0 0.0
    %1516 = vmatprep.subr.mxu0 0.0
    %1517 = vmatpush1.msra.mxu0 0.0
    %1518 = vmatprep.subr.mxu0 0.0
    %1519 = vmatpush1.msra.mxu0 0.0
    %1520 = vmatprep.subr.mxu0 0.0
    %1521 = vmatpush1.msra.mxu0 0.0
    %1522 = vmatprep.subr.mxu0 0.0
    %1523 = vmatpush1.msra.mxu0 0.0
    %1524 = vmatprep.subr.mxu0 0.0
    %1525 = vmatpush1.msra.mxu0 0.0
    %1526 = vmatprep.subr.mxu0 0.0
    %1527 = vmatpush1.msra.mxu0 0.0
    %1528 = vmatprep.subr.mxu0 0.0
    %1529 = vmatpush1.msra.mxu0 0.0
    %1530 = vmatprep.subr.mxu0 0.0
    %1531 = vmatpush1.msra.mxu0 0.0
    %1532 = vmatprep.subr.mxu0 %v1500
    %1533 = vmatpush1.msra.mxu0 %v1497
    %1534 = vmatprep.subr.mxu0 0.0
    %1535 = vmatpush2.msra.mxu0 0.0
    %1536 = vmatprep.subr.mxu0 0.0
    %1537 = vmatpush2.msra.mxu0 0.0
    %1538 = vmatprep.subr.mxu0 0.0
    %1539 = vmatpush2.msra.mxu0 0.0
    %1540 = vmatprep.subr.mxu0 0.0
    %1541 = vmatpush2.msra.mxu0 0.0
    %1542 = vmatprep.subr.mxu0 0.0
    %1543 = vmatpush2.msra.mxu0 0.0
    %1544 = vmatprep.subr.mxu0 0.0
    %1545 = vmatpush2.msra.mxu0 0.0
    %1546 = vmatprep.subr.mxu0 0.0
    %1547 = vmatpush2.msra.mxu0 0.0
    %1548 = vmatprep.subr.mxu0 0.0
    %1549 = vmatpush2.msra.mxu0 0.0
    %1550 = vmatprep.subr.mxu0 0.0
    %1551 = vmatpush2.msra.mxu0 0.0
    %1552 = vmatprep.subr.mxu0 0.0
    %1553 = vmatpush2.msra.mxu0 0.0
    %1554 = vmatprep.subr.mxu0 0.0
    %1555 = vmatpush2.msra.mxu0 0.0
    %1556 = vmatprep.subr.mxu0 0.0
    %1557 = vmatpush2.msra.mxu0 0.0
    %1558 = vmatprep.subr.mxu0 0.0
    %1559 = vmatpush2.msra.mxu0 0.0
    %1560 = vmatprep.subr.mxu0 0.0
    %1561 = vmatpush2.msra.mxu0 0.0
    %1562 = vmatprep.subr.mxu0 0.0
    %1563 = vmatpush2.msra.mxu0 0.0
    %1564 = vmatprep.subr.mxu0 0.0
    %1565 = vmatpush2.msra.mxu0 0.0
    %1566 = vmatprep.mubr.f32.mxu0 0.0
    %1567 = vmatmul.mubr.f32.gmra.mxu0 %v1484
    %v1568 = vpop.f32.mrf.mxu0
    %v1569 = vadd.f32 0.0, %v1568
    %v1570 = vpop.f32.mrf.mxu0
    %v1571 = vadd.f32 0.0, %v1570
    %1572 = vmatprep.mubr.f32.mxu0 0.0
    %1573 = vmatmul.mubr.f32.gmra.mxu0 %v1487
    %v1574 = vpop.f32.mrf.mxu0
    %v1575 = vadd.f32 0.0, %v1574
    %v1576 = vpop.f32.mrf.mxu0
    %v1577 = vadd.f32 0.0, %v1576
    %1578 = vmatprep.mubr.f32.mxu0 0.0
    %1579 = vmatmul.mubr.f32.gmra.mxu0 %v1490
    %v1580 = vpop.f32.mrf.mxu0
    %v1581 = vadd.f32 0.0, %v1580
    %v1582 = vpop.f32.mrf.mxu0
    %v1583 = vadd.f32 0.0, %v1582
    %1584 = vmatprep.mubr.f32.mxu0 0.0
    %1585 = vmatmul.mubr.f32.gmra.mxu0 %v1493
    %v1586 = vpop.f32.mrf.mxu0
    %v1587 = vadd.f32 0.0, %v1586
    %v1588 = vpop.f32.mrf.mxu0
    %v1589 = vadd.f32 0.0, %v1588
    %1590 = vdwg.mxu0
    %v1591 = vmul.f32 %v1163, %v1569
    %v1592 = vmul.f32 %v1165, %v1571
    %v1593 = vmul.f32 %v1169, %v1575
    %v1594 = vmul.f32 %v1171, %v1577
    %v1595 = vmul.f32 %v1175, %v1581
    %v1596 = vmul.f32 %v1177, %v1583
    %v1597 = vmul.f32 %v1181, %v1587
    %v1598 = vmul.f32 %v1183, %v1589
    %v1599 = vadd.f32 %v1591, %v52
    %v1600 = vadd.f32 %v1592, %v53
    %v1601 = vadd.f32 %v1593, %v54
    %v1602 = vadd.f32 %v1594, %v55
    %v1603 = vadd.f32 %v1595, %v56
    %v1604 = vadd.f32 %v1596, %v57
    %v1605 = vadd.f32 %v1597, %v58
    %v1606 = vadd.f32 %v1598, %v59
    %1607 = vst [vmem:[%s11] sm:$0xff] %v1599
    %1608 = vst [vmem:[%s11 + $0x8] sm:$0xff] %v1600
    %1609 = vst [vmem:[%s11 + $0x10] sm:$0xff] %v1601
    %1610 = vst [vmem:[%s11 + $0x18] sm:$0xff] %v1602
    %1611 = vst [vmem:[%s11 + $0x20] sm:$0xff] %v1603
    %1612 = vst [vmem:[%s11 + $0x28] sm:$0xff] %v1604
    %1613 = vst [vmem:[%s11 + $0x30] sm:$0xff] %v1605
    %1614 = vst [vmem:[%s11 + $0x38] sm:$0xff] %v1606
    // Predicated region
    $region50: #{rcab_pallas.1} parent=1 // pred_check
      _
    $region51: #{rcab_pallas.1} parent=1 // pred_check_branch
      %1616 = sbr.rel (0) target = $region53
    $region52: #{rcab_pallas.1} parent=1 // pred_region
      _
    $region53: #{rcab_pallas.1} parent=1 // pred_fallthru
      _
    // Predicated region
    $region54: #{rcab_pallas.1} parent=1 // pred_check
      _
    $region55: #{rcab_pallas.1} parent=1 // pred_check_branch
      %1618 = sbr.rel (0) target = $region57
    $region56: #{rcab_pallas.1} parent=1 // pred_region
      _
    $region57: #{rcab_pallas.1} parent=1 // pred_fallthru
      _
    %1619 = vsyncpa [#allocation3], 1

</llo_original>
